<compile_context>
chip_gen: v6e
topology: v6e:2x2x1
jax: 0.10.0
libtpu: 0.0.40
codegen_flags: <defaults>
</compile_context>

<pallas_src>
import jax
import jax.numpy as jnp
from jax import lax
from jax.experimental import pallas as pl
from jax.experimental.pallas import tpu as pltpu

LANE = 128
MXU_DTYPE = jnp.bfloat16        # matmul-operand storage dtype (f32 accumulation kept)
VMEM_LIMIT = 48 * 1024 * 1024   # raise scoped VMEM above the 16/32 MiB defaults, < v7x physical


def _round_up(v, m):
    return ((v + m - 1) // m) * m


def _pad2(a, rows, cols):
    return jnp.pad(a, ((0, rows - a.shape[0]), (0, cols - a.shape[1])))


# ---------------------------------------------------------------------------
# Kernel 1: encoders (everything except the per-destination softmax/aggregate)
# ---------------------------------------------------------------------------
def encode_kernel(x_ref, w1_ref, b1_ref, wg_ref, asrc_ref, adst_ref,
                  w2aT_ref, b2aT_ref, w2bT_ref, b2bT_ref,
                  xw_ref, asrc_row_ref, adst_col_ref, zaT_ref):
    x = x_ref[...]                                                     # (N, D) f32

    # structure encoder MLP: h = relu(x @ W1 + b1)
    h = jnp.dot(x, w1_ref[...], preferred_element_type=jnp.float32) + b1_ref[...]
    h = jnp.maximum(h, 0.0)                                            # (N, Hh)

    # GAT linear part (no bias)
    xw = jnp.dot(h, wg_ref[...], preferred_element_type=jnp.float32)   # (N, E)
    xw_ref[...] = xw.astype(xw_ref.dtype)

    # attention scores as tiny NT matmuls on the MXU (no XLU cross-lane reduction)
    asrc_row_ref[...] = lax.dot_general(                               # (1, N)
        asrc_ref[...], xw, (((1,), (1,)), ((), ())),
        preferred_element_type=jnp.float32)
    adst_col_ref[...] = lax.dot_general(                               # (N, 1)
        xw, adst_ref[...], (((1,), (1,)), ((), ())),
        preferred_element_type=jnp.float32)

    # attribute encoder computed transposed (weights pre-transposed in wrapper):
    #   Za^T = W2b^T @ relu(W2a^T @ x + b2a^T) + b2b^T      -> (E, D)
    a1t = jnp.dot(w2aT_ref[...], x, preferred_element_type=jnp.float32) + b2aT_ref[...]
    a1t = jnp.maximum(a1t, 0.0)                                        # (Hh, D)
    zat = jnp.dot(w2bT_ref[...], a1t, preferred_element_type=jnp.float32) + b2bT_ref[...]
    zaT_ref[...] = zat.astype(zaT_ref.dtype)                           # (E, D)


# ---------------------------------------------------------------------------
# Kernel 2: GAT masked softmax + aggregate, tiled over destination rows
# ---------------------------------------------------------------------------
def gat_kernel(adj_ref, xw_ref, asrc_row_ref, adst_col_ref, bg_ref, zv_ref):
    # logits for this tile of destination rows vs. all source nodes
    e = adst_col_ref[...] + asrc_row_ref[...]             # (T,1)+(1,N) -> (T, N)
    e = jnp.maximum(e, 0.2 * e)                           # leaky_relu, slope 0.2
    adj = adj_ref[...].astype(jnp.float32)                # int8 mask tile -> f32
    e = jnp.where(adj > 0.0, e, jnp.float32(-1e30))       # mask non-edges
    e = e - jnp.max(e, axis=-1, keepdims=True)
    p = jnp.exp(e)                                        # masked terms underflow to 0
    p = p * pl.reciprocal(jnp.sum(p, axis=-1, keepdims=True), approx=True)
    zv = jnp.dot(p.astype(MXU_DTYPE), xw_ref[...],
                 preferred_element_type=jnp.float32) + bg_ref[...]
    zv_ref[...] = jnp.maximum(zv, 0.0).astype(zv_ref.dtype)


# ---------------------------------------------------------------------------
# Kernel 3: decoders, tiled over rows (no transposes: NT dot_general / Za^T)
# ---------------------------------------------------------------------------
def decode_kernel(zv_tile_ref, zv_full_ref, zaT_ref, s_ref, xrec_ref):
    zv_t = zv_tile_ref[...]
    s_ref[...] = lax.dot_general(                         # Zv_tile @ Zv^T   (NT)
        zv_t, zv_full_ref[...], (((1,), (1,)), ((), ())),
        preferred_element_type=jnp.float32)
    xrec_ref[...] = jnp.dot(                              # Zv_tile @ Za^T   (NN)
        zv_t, zaT_ref[...], preferred_element_type=jnp.float32)


# ---------------------------------------------------------------------------
# Wrapper
# ---------------------------------------------------------------------------
@jax.jit
def anomalydae_forward(x, edge_index, params):
    """x: (N, D) float32, edge_index: (2, M) int32 (row 0 = src, row 1 = dst)."""
    N, D = x.shape
    Hh = params["w1"].shape[1]
    E = params["wg"].shape[1]

    n_pad = _round_up(N, LANE)
    d_pad = _round_up(D, LANE)
    hh_pad = _round_up(Hh, LANE)
    e_pad = _round_up(E, LANE)
    tile = 256 if n_pad % 256 == 0 else 128
    grid = (n_pad // tile,)

    # ---- pad operands so every matmul / store is lane-dense (multiple of 128)
    x_p = _pad2(x.astype(jnp.float32), n_pad, d_pad)
    w1 = _pad2(params["w1"], d_pad, hh_pad)
    b1 = _pad2(params["b1"], 1, hh_pad)
    wg = _pad2(params["wg"], hh_pad, e_pad)
    asrc = _pad2(params["att_src"], 1, e_pad)
    adst = _pad2(params["att_dst"], 1, e_pad)
    bg = _pad2(params["bg"], 1, e_pad)
    # attribute-encoder weights pre-transposed (once, in the wrapper) so the kernel
    # never materializes x.T / za.T through the XLU.
    w2aT = _pad2(params["w2a"], n_pad, hh_pad).T        # (Hh, N)
    b2aT = _pad2(params["b2a"], 1, hh_pad).T            # (Hh, 1)
    w2bT = _pad2(params["w2b"], hh_pad, e_pad).T        # (E, Hh)
    b2bT = _pad2(params["b2b"], 1, e_pad).T             # (E, 1)

    # ---- dense int8 adjacency mask with self loops: adj[dst, src] = 1
    # TODO(synk): for very large graphs build the per-row-tile mask in-kernel from a
    # scalar-prefetched neighbor table instead of a dense N^2 scatter in the wrapper.
    adj = jnp.zeros((n_pad, n_pad), jnp.int8)
    adj = adj.at[edge_index[1], edge_index[0]].set(jnp.int8(1))
    node_ids = jnp.arange(N)
    adj = adj.at[node_ids, node_ids].set(jnp.int8(1))   # add_self_loops=True

    vmem = pl.BlockSpec(memory_space=pltpu.MemorySpace.VMEM)

    # ---- 1) encoders -------------------------------------------------------
    xw, asrc_row, adst_col, zaT = pl.pallas_call(
        encode_kernel,
        out_shape=(jax.ShapeDtypeStruct((n_pad, e_pad), MXU_DTYPE),    # xw
                   jax.ShapeDtypeStruct((1, n_pad), jnp.float32),      # per-source score
                   jax.ShapeDtypeStruct((n_pad, 1), jnp.float32),      # per-dest score
                   jax.ShapeDtypeStruct((e_pad, d_pad), MXU_DTYPE)),   # Za^T
        in_specs=[vmem] * 10,
        out_specs=(vmem, vmem, vmem, vmem),
        compiler_params=pltpu.CompilerParams(vmem_limit_bytes=VMEM_LIMIT),
    )(x_p, w1, b1, wg, asrc, adst, w2aT, b2aT, w2bT, b2bT)

    # ---- 2) GAT attention + aggregate, gridded over destination-row tiles --
    zv = pl.pallas_call(
        gat_kernel,
        out_shape=jax.ShapeDtypeStruct((n_pad, e_pad), MXU_DTYPE),
        grid=grid,
        in_specs=[
            pl.BlockSpec((tile, n_pad), lambda i: (i, 0)),    # adj row tile (int8)
            pl.BlockSpec((n_pad, e_pad), lambda i: (0, 0)),   # xw (resident)
            pl.BlockSpec((1, n_pad), lambda i: (0, 0)),       # per-source scores
            pl.BlockSpec((tile, 1), lambda i: (i, 0)),        # per-dest scores tile
            pl.BlockSpec((1, e_pad), lambda i: (0, 0)),       # GAT bias
        ],
        out_specs=pl.BlockSpec((tile, e_pad), lambda i: (i, 0)),
        compiler_params=pltpu.CompilerParams(
            dimension_semantics=("parallel",),
            vmem_limit_bytes=VMEM_LIMIT),
    )(adj, xw, asrc_row, adst_col, bg)

    # ---- 3) decoders, gridded over row tiles -------------------------------
    s_pad, xrec_pad = pl.pallas_call(
        decode_kernel,
        out_shape=(jax.ShapeDtypeStruct((n_pad, n_pad), jnp.float32),
                   jax.ShapeDtypeStruct((n_pad, d_pad), jnp.float32)),
        grid=grid,
        in_specs=[
            pl.BlockSpec((tile, e_pad), lambda i: (i, 0)),    # Zv row tile
            pl.BlockSpec((n_pad, e_pad), lambda i: (0, 0)),   # Zv (resident)
            pl.BlockSpec((e_pad, d_pad), lambda i: (0, 0)),   # Za^T (resident)
        ],
        out_specs=(pl.BlockSpec((tile, n_pad), lambda i: (i, 0)),
                   pl.BlockSpec((tile, d_pad), lambda i: (i, 0))),
        compiler_params=pltpu.CompilerParams(
            dimension_semantics=("parallel",),
            vmem_limit_bytes=VMEM_LIMIT),
    )(zv, zv, zaT)

    return s_pad[:N, :N], xrec_pad[:N, :D]


def init_params(key, node_num, n_dim, n_hidden, embed_dim):
    ks = jax.random.split(key, 8)
    scale = 0.1
    return {
        # stru_enc_fc: Linear(n_dim, n_hidden) + ReLU
        "w1": scale * jax.random.normal(ks[0], (n_dim, n_hidden), jnp.float32),
        "b1": scale * jax.random.normal(ks[1], (1, n_hidden), jnp.float32),
        # stru_enc_gat: GATConv(n_hidden, embed_dim, heads=1)
        "wg": scale * jax.random.normal(ks[2], (n_hidden, embed_dim), jnp.float32),
        "att_src": scale * jax.random.normal(ks[3], (1, embed_dim), jnp.float32),
        "att_dst": scale * jax.random.normal(ks[4], (1, embed_dim), jnp.float32),
        "bg": jnp.zeros((1, embed_dim), jnp.float32),
        # attr_enc: Linear(node_num, n_hidden) + ReLU + Linear(n_hidden, embed_dim)
        "w2a": scale * jax.random.normal(ks[5], (node_num, n_hidden), jnp.float32),
        "b2a": scale * jax.random.normal(ks[6], (1, n_hidden), jnp.float32),
        "w2b": scale * jax.random.normal(ks[7], (n_hidden, embed_dim), jnp.float32),
        "b2b": jnp.zeros((1, embed_dim), jnp.float32),
    }


if __name__ == "__main__":
    node_num, n_dim, n_hidden, embed_dim = 16, 8, 32, 16

    key = jax.random.PRNGKey(0)
    kx, kp = jax.random.split(key)
    x = jax.random.normal(kx, (node_num, n_dim), jnp.float32)

    # Deterministic small graph: bidirectional ring (no duplicate / self edges).
    src = jnp.arange(node_num, dtype=jnp.int32)
    dst = (src + 1) % node_num
    edge_index = jnp.concatenate(
        [jnp.stack([src, dst], axis=0), jnp.stack([dst, src], axis=0)], axis=1)

    params = init_params(kp, node_num, n_dim, n_hidden, embed_dim)

    s_rec, x_rec = anomalydae_forward(x, edge_index, params)
    jax.block_until_ready((s_rec, x_rec))
    assert s_rec.shape == (node_num, node_num)
    assert x_rec.shape == (node_num, n_dim)
    print("KERNEL_OK")
</pallas_src>

<mosaic_0001>
module attributes {stable_mosaic.version = 11 : i64} {
  func.func @encode_kernel(%arg0: memref<128x128xf32, #tpu.memory_space<vmem>>, %arg1: memref<128x128xf32, #tpu.memory_space<vmem>>, %arg2: memref<1x128xf32, #tpu.memory_space<vmem>>, %arg3: memref<128x128xf32, #tpu.memory_space<vmem>>, %arg4: memref<1x128xf32, #tpu.memory_space<vmem>>, %arg5: memref<1x128xf32, #tpu.memory_space<vmem>>, %arg6: memref<128x128xf32, #tpu.memory_space<vmem>>, %arg7: memref<128x1xf32, #tpu.memory_space<vmem>>, %arg8: memref<128x128xf32, #tpu.memory_space<vmem>>, %arg9: memref<128x1xf32, #tpu.memory_space<vmem>>, %arg10: memref<128x128xbf16, #tpu.memory_space<vmem>>, %arg11: memref<1x128xf32, #tpu.memory_space<vmem>>, %arg12: memref<128x1xf32, #tpu.memory_space<vmem>>, %arg13: memref<128x128xbf16, #tpu.memory_space<vmem>>) attributes {dimension_semantics = [], scalar_prefetch = 0 : i64, scratch_operands = 0 : i64, tpu.core_type = #tpu.core_type<tc>} {
    %c0 = arith.constant 0 : index
    %c0_0 = arith.constant 0 : index
    %0 = vector.load %arg0[%c0, %c0_0] : memref<128x128xf32, #tpu.memory_space<vmem>>, vector<128x128xf32>
    %c0_1 = arith.constant 0 : index
    %c0_2 = arith.constant 0 : index
    %1 = vector.load %arg1[%c0_1, %c0_2] : memref<128x128xf32, #tpu.memory_space<vmem>>, vector<128x128xf32>
    %cst = arith.constant dense<0.000000e+00> : vector<128x128xf32>
    %2 = tpu.matmul %0, %1, %cst {dimension_numbers = #tpu.dot_dimension_numbers<[1], [0], [0], [1], [0, 0, 1, 1], [], []>} : vector<128x128xf32>, vector<128x128xf32>, vector<128x128xf32> -> vector<128x128xf32>
    %c0_3 = arith.constant 0 : index
    %c0_4 = arith.constant 0 : index
    %3 = vector.load %arg2[%c0_3, %c0_4] : memref<1x128xf32, #tpu.memory_space<vmem>>, vector<1x128xf32>
    %4 = vector.broadcast %3 : vector<1x128xf32> to vector<128x128xf32>
    %5 = arith.addf %2, %4 : vector<128x128xf32>
    %cst_5 = arith.constant 0.000000e+00 : f32
    %6 = vector.broadcast %cst_5 : f32 to vector<128x128xf32>
    %7 = arith.maximumf %5, %6 : vector<128x128xf32>
    %c0_6 = arith.constant 0 : index
    %c0_7 = arith.constant 0 : index
    %8 = vector.load %arg3[%c0_6, %c0_7] : memref<128x128xf32, #tpu.memory_space<vmem>>, vector<128x128xf32>
    %cst_8 = arith.constant dense<0.000000e+00> : vector<128x128xf32>
    %9 = tpu.matmul %7, %8, %cst_8 {dimension_numbers = #tpu.dot_dimension_numbers<[1], [0], [0], [1], [0, 0, 1, 1], [], []>} : vector<128x128xf32>, vector<128x128xf32>, vector<128x128xf32> -> vector<128x128xf32>
    %10 = arith.truncf %9 : vector<128x128xf32> to vector<128x128xbf16>
    %c0_9 = arith.constant 0 : index
    %c0_10 = arith.constant 0 : index
    %11 = vector.load %arg10[%c0_9, %c0_10] : memref<128x128xbf16, #tpu.memory_space<vmem>>, vector<128x128xbf16>
    tpu.vector_store %arg10[%c0_9, %c0_10], %10 {strides = array<i32>} : memref<128x128xbf16, #tpu.memory_space<vmem>>, vector<128x128xbf16>,
    %c0_11 = arith.constant 0 : index
    %c0_12 = arith.constant 0 : index
    %12 = vector.load %arg4[%c0_11, %c0_12] : memref<1x128xf32, #tpu.memory_space<vmem>>, vector<1x128xf32>
    %cst_13 = arith.constant dense<0.000000e+00> : vector<1x128xf32>
    %13 = tpu.matmul %12, %9, %cst_13 {dimension_numbers = #tpu.dot_dimension_numbers<[1], [1], [0], [0], [0, 0, 1, 0], [], []>} : vector<1x128xf32>, vector<128x128xf32>, vector<1x128xf32> -> vector<1x128xf32>
    %c0_14 = arith.constant 0 : index
    %c0_15 = arith.constant 0 : index
    %14 = vector.load %arg11[%c0_14, %c0_15] : memref<1x128xf32, #tpu.memory_space<vmem>>, vector<1x128xf32>
    tpu.vector_store %arg11[%c0_14, %c0_15], %13 {strides = array<i32>} : memref<1x128xf32, #tpu.memory_space<vmem>>, vector<1x128xf32>,
    %c0_16 = arith.constant 0 : index
    %c0_17 = arith.constant 0 : index
    %15 = vector.load %arg5[%c0_16, %c0_17] : memref<1x128xf32, #tpu.memory_space<vmem>>, vector<1x128xf32>
    %cst_18 = arith.constant dense<0.000000e+00> : vector<128x1xf32>
    %16 = tpu.matmul %9, %15, %cst_18 {dimension_numbers = #tpu.dot_dimension_numbers<[1], [1], [0], [0], [0, 0, 1, 0], [], []>} : vector<128x128xf32>, vector<1x128xf32>, vector<128x1xf32> -> vector<128x1xf32>
    %c0_19 = arith.constant 0 : index
    %c0_20 = arith.constant 0 : index
    %17 = vector.load %arg12[%c0_19, %c0_20] : memref<128x1xf32, #tpu.memory_space<vmem>>, vector<128x1xf32>
    tpu.vector_store %arg12[%c0_19, %c0_20], %16 {strides = array<i32>} : memref<128x1xf32, #tpu.memory_space<vmem>>, vector<128x1xf32>,
    %c0_21 = arith.constant 0 : index
    %c0_22 = arith.constant 0 : index
    %18 = vector.load %arg6[%c0_21, %c0_22] : memref<128x128xf32, #tpu.memory_space<vmem>>, vector<128x128xf32>
    %cst_23 = arith.constant dense<0.000000e+00> : vector<128x128xf32>
    %19 = tpu.matmul %18, %0, %cst_23 {dimension_numbers = #tpu.dot_dimension_numbers<[1], [0], [0], [1], [0, 0, 1, 1], [], []>} : vector<128x128xf32>, vector<128x128xf32>, vector<128x128xf32> -> vector<128x128xf32>
    %c0_24 = arith.constant 0 : index
    %c0_25 = arith.constant 0 : index
    %20 = vector.load %arg7[%c0_24, %c0_25] : memref<128x1xf32, #tpu.memory_space<vmem>>, vector<128x1xf32>
    %21 = vector.broadcast %20 : vector<128x1xf32> to vector<128x128xf32>
    %22 = arith.addf %19, %21 : vector<128x128xf32>
    %cst_26 = arith.constant 0.000000e+00 : f32
    %23 = vector.broadcast %cst_26 : f32 to vector<128x128xf32>
    %24 = arith.maximumf %22, %23 : vector<128x128xf32>
    %c0_27 = arith.constant 0 : index
    %c0_28 = arith.constant 0 : index
    %25 = vector.load %arg8[%c0_27, %c0_28] : memref<128x128xf32, #tpu.memory_space<vmem>>, vector<128x128xf32>
    %cst_29 = arith.constant dense<0.000000e+00> : vector<128x128xf32>
    %26 = tpu.matmul %25, %24, %cst_29 {dimension_numbers = #tpu.dot_dimension_numbers<[1], [0], [0], [1], [0, 0, 1, 1], [], []>} : vector<128x128xf32>, vector<128x128xf32>, vector<128x128xf32> -> vector<128x128xf32>
    %c0_30 = arith.constant 0 : index
    %c0_31 = arith.constant 0 : index
    %27 = vector.load %arg9[%c0_30, %c0_31] : memref<128x1xf32, #tpu.memory_space<vmem>>, vector<128x1xf32>
    %28 = vector.broadcast %27 : vector<128x1xf32> to vector<128x128xf32>
    %29 = arith.addf %26, %28 : vector<128x128xf32>
    %30 = arith.truncf %29 : vector<128x128xf32> to vector<128x128xbf16>
    %c0_32 = arith.constant 0 : index
    %c0_33 = arith.constant 0 : index
    %31 = vector.load %arg13[%c0_32, %c0_33] : memref<128x128xbf16, #tpu.memory_space<vmem>>, vector<128x128xbf16>
    tpu.vector_store %arg13[%c0_32, %c0_33], %30 {strides = array<i32>} : memref<128x128xbf16, #tpu.memory_space<vmem>>, vector<128x128xbf16>,
    return
  }
}

module attributes {stable_mosaic.version = 11 : i64} {
  func.func @gat_kernel(%arg0: i32, %arg1: memref<128x128xi8, #tpu.memory_space<vmem>>, %arg2: memref<128x128xbf16, #tpu.memory_space<vmem>>, %arg3: memref<1x128xf32, #tpu.memory_space<vmem>>, %arg4: memref<128x1xf32, #tpu.memory_space<vmem>>, %arg5: memref<1x128xf32, #tpu.memory_space<vmem>>, %arg6: memref<128x128xbf16, #tpu.memory_space<vmem>>) attributes {dimension_semantics = [#tpu.dimension_semantics<parallel>], iteration_bounds = array<i64: 1>, scalar_prefetch = 0 : i64, scratch_operands = 0 : i64, tpu.core_type = #tpu.core_type<tc>, window_params = [{transform_indices = @transform_0, window_bounds = array<i64: 128, 128>}, {pipeline_mode = #tpu.pipeline_mode<synchronous>, transform_indices = @transform_1, window_bounds = array<i64: 128, 128>}, {pipeline_mode = #tpu.pipeline_mode<synchronous>, transform_indices = @transform_2, window_bounds = array<i64: 1, 128>}, {transform_indices = @transform_3, window_bounds = array<i64: 128, 1>}, {pipeline_mode = #tpu.pipeline_mode<synchronous>, transform_indices = @transform_4, window_bounds = array<i64: 1, 128>}, {transform_indices = @transform_5, window_bounds = array<i64: 128, 128>}]} {
    %c0 = arith.constant 0 : index
    %c0_0 = arith.constant 0 : index
    %0 = vector.load %arg4[%c0, %c0_0] : memref<128x1xf32, #tpu.memory_space<vmem>>, vector<128x1xf32>
    %c0_1 = arith.constant 0 : index
    %c0_2 = arith.constant 0 : index
    %1 = vector.load %arg3[%c0_1, %c0_2] : memref<1x128xf32, #tpu.memory_space<vmem>>, vector<1x128xf32>
    %2 = vector.broadcast %0 : vector<128x1xf32> to vector<128x128xf32>
    %3 = vector.broadcast %1 : vector<1x128xf32> to vector<128x128xf32>
    %4 = arith.addf %2, %3 : vector<128x128xf32>
    %cst = arith.constant 2.000000e-01 : f32
    %5 = vector.broadcast %cst : f32 to vector<128x128xf32>
    %6 = arith.mulf %5, %4 : vector<128x128xf32>
    %7 = arith.maximumf %4, %6 : vector<128x128xf32>
    %c0_3 = arith.constant 0 : index
    %c0_4 = arith.constant 0 : index
    %8 = vector.load %arg1[%c0_3, %c0_4] : memref<128x128xi8, #tpu.memory_space<vmem>>, vector<128x128xi8>
    %9 = arith.sitofp %8 : vector<128x128xi8> to vector<128x128xf32>
    %cst_5 = arith.constant 0.000000e+00 : f32
    %10 = vector.broadcast %cst_5 : f32 to vector<128x128xf32>
    %11 = arith.cmpf ogt, %9, %10 : vector<128x128xf32>
    %cst_6 = arith.constant -1.000000e+30 : f32
    %12 = vector.broadcast %cst_6 : f32 to vector<128x128xf32>
    %13 = arith.select %11, %7, %12 : vector<128x128xi1>, vector<128x128xf32>
    %cst_7 = arith.constant dense<0xFF800000> : vector<128xf32>
    %14 = vector.multi_reduction <maximumf>, %13, %cst_7 [1] : vector<128x128xf32> to vector<128xf32>
    %15 = vector.shape_cast %14 : vector<128xf32> to vector<128x1xf32>
    %16 = vector.broadcast %15 : vector<128x1xf32> to vector<128x128xf32>
    %17 = arith.subf %13, %16 : vector<128x128xf32>
    %18 = math.exp %17 : vector<128x128xf32>
    %cst_8 = arith.constant dense<0.000000e+00> : vector<128xf32>
    %19 = vector.multi_reduction <add>, %18, %cst_8 [1] : vector<128x128xf32> to vector<128xf32>
    %20 = vector.shape_cast %19 : vector<128xf32> to vector<128x1xf32>
    %21 = tpu.reciprocal %20 {approx = true} : vector<128x1xf32> -> vector<128x1xf32>
    %22 = vector.broadcast %21 : vector<128x1xf32> to vector<128x128xf32>
    %23 = arith.mulf %18, %22 : vector<128x128xf32>
    %24 = arith.truncf %23 : vector<128x128xf32> to vector<128x128xbf16>
    %c0_9 = arith.constant 0 : index
    %c0_10 = arith.constant 0 : index
    %25 = vector.load %arg2[%c0_9, %c0_10] : memref<128x128xbf16, #tpu.memory_space<vmem>>, vector<128x128xbf16>
    %cst_11 = arith.constant dense<0.000000e+00> : vector<128x128xf32>
    %26 = tpu.matmul %24, %25, %cst_11 {dimension_numbers = #tpu.dot_dimension_numbers<[1], [0], [0], [1], [0, 0, 1, 1], [], []>} : vector<128x128xbf16>, vector<128x128xbf16>, vector<128x128xf32> -> vector<128x128xf32>
    %c0_12 = arith.constant 0 : index
    %c0_13 = arith.constant 0 : index
    %27 = vector.load %arg5[%c0_12, %c0_13] : memref<1x128xf32, #tpu.memory_space<vmem>>, vector<1x128xf32>
    %28 = vector.broadcast %27 : vector<1x128xf32> to vector<128x128xf32>
    %29 = arith.addf %26, %28 : vector<128x128xf32>
    %cst_14 = arith.constant 0.000000e+00 : f32
    %30 = vector.broadcast %cst_14 : f32 to vector<128x128xf32>
    %31 = arith.maximumf %29, %30 : vector<128x128xf32>
    %32 = arith.truncf %31 : vector<128x128xf32> to vector<128x128xbf16>
    %c0_15 = arith.constant 0 : index
    %c0_16 = arith.constant 0 : index
    %33 = vector.load %arg6[%c0_15, %c0_16] : memref<128x128xbf16, #tpu.memory_space<vmem>>, vector<128x128xbf16>
    tpu.vector_store %arg6[%c0_15, %c0_16], %32 {strides = array<i32>} : memref<128x128xbf16, #tpu.memory_space<vmem>>, vector<128x128xbf16>,
    return
  }
  func.func @transform_0(%arg0: i32) -> (i32, i32) {
    %c0_i32 = arith.constant 0 : i32
    %c0_i32_0 = arith.constant 0 : i32
    return %arg0, %c0_i32 : i32, i32
  }
  func.func @transform_1(%arg0: i32) -> (i32, i32) {
    %c0_i32 = arith.constant 0 : i32
    %c0_i32_0 = arith.constant 0 : i32
    %c0_i32_1 = arith.constant 0 : i32
    return %c0_i32, %c0_i32_0 : i32, i32
  }
  func.func @transform_2(%arg0: i32) -> (i32, i32) {
    %c0_i32 = arith.constant 0 : i32
    %c0_i32_0 = arith.constant 0 : i32
    %c0_i32_1 = arith.constant 0 : i32
    return %c0_i32, %c0_i32_0 : i32, i32
  }
  func.func @transform_3(%arg0: i32) -> (i32, i32) {
    %c0_i32 = arith.constant 0 : i32
    %c0_i32_0 = arith.constant 0 : i32
    return %arg0, %c0_i32 : i32, i32
  }
  func.func @transform_4(%arg0: i32) -> (i32, i32) {
    %c0_i32 = arith.constant 0 : i32
    %c0_i32_0 = arith.constant 0 : i32
    %c0_i32_1 = arith.constant 0 : i32
    return %c0_i32, %c0_i32_0 : i32, i32
  }
  func.func @transform_5(%arg0: i32) -> (i32, i32) {
    %c0_i32 = arith.constant 0 : i32
    %c0_i32_0 = arith.constant 0 : i32
    return %arg0, %c0_i32 : i32, i32
  }
}

module attributes {stable_mosaic.version = 11 : i64} {
  func.func @decode_kernel(%arg0: i32, %arg1: memref<128x128xbf16, #tpu.memory_space<vmem>>, %arg2: memref<128x128xbf16, #tpu.memory_space<vmem>>, %arg3: memref<128x128xbf16, #tpu.memory_space<vmem>>, %arg4: memref<128x128xf32, #tpu.memory_space<vmem>>, %arg5: memref<128x128xf32, #tpu.memory_space<vmem>>) attributes {dimension_semantics = [#tpu.dimension_semantics<parallel>], iteration_bounds = array<i64: 1>, scalar_prefetch = 0 : i64, scratch_operands = 0 : i64, tpu.core_type = #tpu.core_type<tc>, window_params = [{transform_indices = @transform_0, window_bounds = array<i64: 128, 128>}, {pipeline_mode = #tpu.pipeline_mode<synchronous>, transform_indices = @transform_1, window_bounds = array<i64: 128, 128>}, {pipeline_mode = #tpu.pipeline_mode<synchronous>, transform_indices = @transform_2, window_bounds = array<i64: 128, 128>}, {transform_indices = @transform_3, window_bounds = array<i64: 128, 128>}, {transform_indices = @transform_4, window_bounds = array<i64: 128, 128>}]} {
    %c0 = arith.constant 0 : index
    %c0_0 = arith.constant 0 : index
    %0 = vector.load %arg1[%c0, %c0_0] : memref<128x128xbf16, #tpu.memory_space<vmem>>, vector<128x128xbf16>
    %c0_1 = arith.constant 0 : index
    %c0_2 = arith.constant 0 : index
    %1 = vector.load %arg2[%c0_1, %c0_2] : memref<128x128xbf16, #tpu.memory_space<vmem>>, vector<128x128xbf16>
    %cst = arith.constant dense<0.000000e+00> : vector<128x128xf32>
    %2 = tpu.matmul %0, %1, %cst {dimension_numbers = #tpu.dot_dimension_numbers<[1], [1], [0], [0], [0, 0, 1, 0], [], []>} : vector<128x128xbf16>, vector<128x128xbf16>, vector<128x128xf32> -> vector<128x128xf32>
    %c0_3 = arith.constant 0 : index
    %c0_4 = arith.constant 0 : index
    %3 = vector.load %arg4[%c0_3, %c0_4] : memref<128x128xf32, #tpu.memory_space<vmem>>, vector<128x128xf32>
    tpu.vector_store %arg4[%c0_3, %c0_4], %2 {strides = array<i32>} : memref<128x128xf32, #tpu.memory_space<vmem>>, vector<128x128xf32>,
    %c0_5 = arith.constant 0 : index
    %c0_6 = arith.constant 0 : index
    %4 = vector.load %arg3[%c0_5, %c0_6] : memref<128x128xbf16, #tpu.memory_space<vmem>>, vector<128x128xbf16>
    %cst_7 = arith.constant dense<0.000000e+00> : vector<128x128xf32>
    %5 = tpu.matmul %0, %4, %cst_7 {dimension_numbers = #tpu.dot_dimension_numbers<[1], [0], [0], [1], [0, 0, 1, 1], [], []>} : vector<128x128xbf16>, vector<128x128xbf16>, vector<128x128xf32> -> vector<128x128xf32>
    %c0_8 = arith.constant 0 : index
    %c0_9 = arith.constant 0 : index
    %6 = vector.load %arg5[%c0_8, %c0_9] : memref<128x128xf32, #tpu.memory_space<vmem>>, vector<128x128xf32>
    tpu.vector_store %arg5[%c0_8, %c0_9], %5 {strides = array<i32>} : memref<128x128xf32, #tpu.memory_space<vmem>>, vector<128x128xf32>,
    return
  }
  func.func @transform_0(%arg0: i32) -> (i32, i32) {
    %c0_i32 = arith.constant 0 : i32
    %c0_i32_0 = arith.constant 0 : i32
    return %arg0, %c0_i32 : i32, i32
  }
  func.func @transform_1(%arg0: i32) -> (i32, i32) {
    %c0_i32 = arith.constant 0 : i32
    %c0_i32_0 = arith.constant 0 : i32
    %c0_i32_1 = arith.constant 0 : i32
    return %c0_i32, %c0_i32_0 : i32, i32
  }
  func.func @transform_2(%arg0: i32) -> (i32, i32) {
    %c0_i32 = arith.constant 0 : i32
    %c0_i32_0 = arith.constant 0 : i32
    %c0_i32_1 = arith.constant 0 : i32
    return %c0_i32, %c0_i32_0 : i32, i32
  }
  func.func @transform_3(%arg0: i32) -> (i32, i32) {
    %c0_i32 = arith.constant 0 : i32
    %c0_i32_0 = arith.constant 0 : i32
    return %arg0, %c0_i32 : i32, i32
  }
  func.func @transform_4(%arg0: i32) -> (i32, i32) {
    %c0_i32 = arith.constant 0 : i32
    %c0_i32_0 = arith.constant 0 : i32
    return %arg0, %c0_i32 : i32, i32
  }
}

</mosaic_0001>

<llo_original>
// kernel: anomalydae_forward.4
$region0: #{anomalydae_forward.4}
  #allocation0 [shape = 'u32[]', space=smem, size = 0x4, offset = 0x4, fixed_abs, tag = 'smem constant byte address 0x4 - core index']
  #allocation1 [shape = 'u32[144,128]{1,0:T(1,128)}', space=vmem, size = 0x12000, scoped, tag = 'internal scratch']
  %s0 = inlined_call_operand.vmem [shape: s8[128,128], index: 0, kind: input, shape index: {}]
  %s1 = inlined_call_operand.vmem [shape: bf16[128,128], index: 1, kind: input, shape index: {}]
  %s2 = inlined_call_operand.vmem [shape: f32[1,128], index: 2, kind: input, shape index: {}]
  %s3 = inlined_call_operand.vmem [shape: f32[128,1], index: 3, kind: input, shape index: {}]
  %s4 = inlined_call_operand.vmem [shape: f32[1,128], index: 4, kind: input, shape index: {}]
  %s5 = inlined_call_operand.vmem [shape: bf16[128,128], index: 5, kind: output, shape index: {}]
  %s6 = sld [smem:[#allocation0]]
  $region30: #{anomalydae_forward.4} parent=0
    _
  %s8 = ssub.s32 1, %s6
  %s9 = scalar_select 0, %s8, %s6
  // Predicated region
  $region2: #{anomalydae_forward.4} parent=0 // pred_check
    _
  $region3: #{anomalydae_forward.4} parent=0 // pred_check_branch
    %11 = sbr.rel (0) target = $region5
  $region4: #{anomalydae_forward.4} parent=0 // pred_region
    _
  $region5: #{anomalydae_forward.4} parent=0 // pred_fallthru
    _
  // Predicated region
  $region6: #{anomalydae_forward.4} parent=0 // pred_check
    _
  $region7: #{anomalydae_forward.4} parent=0 // pred_check_branch
    %13 = sbr.rel (0) target = $region9
  $region8: #{anomalydae_forward.4} parent=0 // pred_region
    _
  $region9: #{anomalydae_forward.4} parent=0 // pred_fallthru
    _
  // Predicated region
  $region10: #{anomalydae_forward.4} parent=0 // pred_check
    _
  $region11: #{anomalydae_forward.4} parent=0 // pred_check_branch
    %15 = sbr.rel (0) target = $region13
  $region12: #{anomalydae_forward.4} parent=0 // pred_region
    _
  $region13: #{anomalydae_forward.4} parent=0 // pred_fallthru
    _
  // Predicated region
  $region14: #{anomalydae_forward.4} parent=0 // pred_check
    _
  $region15: #{anomalydae_forward.4} parent=0 // pred_check_branch
    %17 = sbr.rel (0) target = $region17
  $region16: #{anomalydae_forward.4} parent=0 // pred_region
    _
  $region17: #{anomalydae_forward.4} parent=0 // pred_fallthru
    _
  // Predicated region
  $region18: #{anomalydae_forward.4} parent=0 // pred_check
    _
  $region19: #{anomalydae_forward.4} parent=0 // pred_check_branch
    %19 = sbr.rel (0) target = $region21
  $region20: #{anomalydae_forward.4} parent=0 // pred_region
    _
  $region21: #{anomalydae_forward.4} parent=0 // pred_fallthru
    _
  %v21 = vld [vmem:[%s3] sm:$0xff]
  %v22 = vld [vmem:[%s3 + $0x8] sm:$0xff]
  %v23 = vld [vmem:[%s3 + $0x10] sm:$0xff]
  %v24 = vld [vmem:[%s3 + $0x18] sm:$0xff]
  %v25 = vld [vmem:[%s3 + $0x20] sm:$0xff]
  %v26 = vld [vmem:[%s3 + $0x28] sm:$0xff]
  %v27 = vld [vmem:[%s3 + $0x30] sm:$0xff]
  %v28 = vld [vmem:[%s3 + $0x38] sm:$0xff]
  %v29 = vld [vmem:[%s3 + $0x40] sm:$0xff]
  %v30 = vld [vmem:[%s3 + $0x48] sm:$0xff]
  %v31 = vld [vmem:[%s3 + $0x50] sm:$0xff]
  %v32 = vld [vmem:[%s3 + $0x58] sm:$0xff]
  %v33 = vld [vmem:[%s3 + $0x60] sm:$0xff]
  %v34 = vld [vmem:[%s3 + $0x68] sm:$0xff]
  %v35 = vld [vmem:[%s3 + $0x70] sm:$0xff]
  %v36 = vld [vmem:[%s3 + $0x78] sm:$0xff]
  %v37 = vld [vmem:[%s2] sm:$0x1]
  %39 = vset.pattern.permute.xlu0 0
  %40 = vperm.xlu0 %39, %v21
  %v41 = vpop.permute.xlu0 %40
  %44 = vset.pattern.permute.xlu0 0
  %45 = vperm.xlu0 %44, %v22
  %v46 = vpop.permute.xlu0 %45
  %49 = vset.pattern.permute.xlu0 0
  %50 = vperm.xlu0 %49, %v23
  %v51 = vpop.permute.xlu0 %50
  %54 = vset.pattern.permute.xlu0 0
  %55 = vperm.xlu0 %54, %v24
  %v56 = vpop.permute.xlu0 %55
  %59 = vset.pattern.permute.xlu0 0
  %60 = vperm.xlu0 %59, %v25
  %v61 = vpop.permute.xlu0 %60
  %64 = vset.pattern.permute.xlu0 0
  %65 = vperm.xlu0 %64, %v26
  %v66 = vpop.permute.xlu0 %65
  %69 = vset.pattern.permute.xlu0 0
  %70 = vperm.xlu0 %69, %v27
  %v71 = vpop.permute.xlu0 %70
  %74 = vset.pattern.permute.xlu0 0
  %75 = vperm.xlu0 %74, %v28
  %v76 = vpop.permute.xlu0 %75
  %79 = vset.pattern.permute.xlu0 0
  %80 = vperm.xlu0 %79, %v29
  %v81 = vpop.permute.xlu0 %80
  %84 = vset.pattern.permute.xlu0 0
  %85 = vperm.xlu0 %84, %v30
  %v86 = vpop.permute.xlu0 %85
  %89 = vset.pattern.permute.xlu0 0
  %90 = vperm.xlu0 %89, %v31
  %v91 = vpop.permute.xlu0 %90
  %94 = vset.pattern.permute.xlu0 0
  %95 = vperm.xlu0 %94, %v32
  %v96 = vpop.permute.xlu0 %95
  %99 = vset.pattern.permute.xlu0 0
  %100 = vperm.xlu0 %99, %v33
  %v101 = vpop.permute.xlu0 %100
  %104 = vset.pattern.permute.xlu0 0
  %105 = vperm.xlu0 %104, %v34
  %v106 = vpop.permute.xlu0 %105
  %109 = vset.pattern.permute.xlu0 0
  %110 = vperm.xlu0 %109, %v35
  %v111 = vpop.permute.xlu0 %110
  %114 = vset.pattern.permute.xlu0 0
  %115 = vperm.xlu0 %114, %v36
  %v116 = vpop.permute.xlu0 %115
  %v119 = vlaneseq
  %v120 = vshrl.u32 %v119, 7
  %v121 = vsub.s32 0, %v120
  %v122 = vrot.slane %v37, %v121
  %v124 = vadd.f32 %v41, %v122
  %v125 = vadd.f32 %v46, %v122
  %v126 = vadd.f32 %v51, %v122
  %v127 = vadd.f32 %v56, %v122
  %v128 = vadd.f32 %v61, %v122
  %v129 = vadd.f32 %v66, %v122
  %v130 = vadd.f32 %v71, %v122
  %v131 = vadd.f32 %v76, %v122
  %v132 = vadd.f32 %v81, %v122
  %v133 = vadd.f32 %v86, %v122
  %v134 = vadd.f32 %v91, %v122
  %v135 = vadd.f32 %v96, %v122
  %v136 = vadd.f32 %v101, %v122
  %v137 = vadd.f32 %v106, %v122
  %v138 = vadd.f32 %v111, %v122
  %v139 = vadd.f32 %v116, %v122
  %v140 = vmul.f32 %v124, 0.2
  %v141 = vmul.f32 %v125, 0.2
  %v142 = vmul.f32 %v126, 0.2
  %v143 = vmul.f32 %v127, 0.2
  %v144 = vmul.f32 %v128, 0.2
  %v145 = vmul.f32 %v129, 0.2
  %v146 = vmul.f32 %v130, 0.2
  %v147 = vmul.f32 %v131, 0.2
  %v148 = vmul.f32 %v132, 0.2
  %v149 = vmul.f32 %v133, 0.2
  %v150 = vmul.f32 %v134, 0.2
  %v151 = vmul.f32 %v135, 0.2
  %v152 = vmul.f32 %v136, 0.2
  %v153 = vmul.f32 %v137, 0.2
  %v154 = vmul.f32 %v138, 0.2
  %v155 = vmul.f32 %v139, 0.2
  %v156 = vmax.f32 %v124, %v140
  %v157 = vmax.f32 %v125, %v141
  %v158 = vmax.f32 %v126, %v142
  %v159 = vmax.f32 %v127, %v143
  %v160 = vmax.f32 %v128, %v144
  %v161 = vmax.f32 %v129, %v145
  %v162 = vmax.f32 %v130, %v146
  %v163 = vmax.f32 %v131, %v147
  %v164 = vmax.f32 %v132, %v148
  %v165 = vmax.f32 %v133, %v149
  %v166 = vmax.f32 %v134, %v150
  %v167 = vmax.f32 %v135, %v151
  %v168 = vmax.f32 %v136, %v152
  %v169 = vmax.f32 %v137, %v153
  %v170 = vmax.f32 %v138, %v154
  %v171 = vmax.f32 %v139, %v155
  %v172 = vld [vmem:[%s0] sm:$0x3]
  %v173 = vld [vmem:[%s0 + $0x2] sm:$0x3]
  %v174 = vld [vmem:[%s0 + $0x4] sm:$0x3]
  %v175 = vld [vmem:[%s0 + $0x6] sm:$0x3]
  %v176 = vld [vmem:[%s0 + $0x8] sm:$0x3]
  %v177 = vld [vmem:[%s0 + $0xa] sm:$0x3]
  %v178 = vld [vmem:[%s0 + $0xc] sm:$0x3]
  %v179 = vld [vmem:[%s0 + $0xe] sm:$0x3]
  %v180 = vld [vmem:[%s0 + $0x10] sm:$0x3]
  %v181 = vld [vmem:[%s0 + $0x12] sm:$0x3]
  %v182 = vld [vmem:[%s0 + $0x14] sm:$0x3]
  %v183 = vld [vmem:[%s0 + $0x16] sm:$0x3]
  %v184 = vld [vmem:[%s0 + $0x18] sm:$0x3]
  %v185 = vld [vmem:[%s0 + $0x1a] sm:$0x3]
  %v186 = vld [vmem:[%s0 + $0x1c] sm:$0x3]
  %v187 = vld [vmem:[%s0 + $0x1e] sm:$0x3]
  %v188 = vunpack.c.0.s8 %v172
  %v189 = vunpack.c.0.s8 %v173
  %v190 = vunpack.c.0.s8 %v174
  %v191 = vunpack.c.0.s8 %v175
  %v192 = vunpack.c.0.s8 %v176
  %v193 = vunpack.c.0.s8 %v177
  %v194 = vunpack.c.0.s8 %v178
  %v195 = vunpack.c.0.s8 %v179
  %v196 = vunpack.c.0.s8 %v180
  %v197 = vunpack.c.0.s8 %v181
  %v198 = vunpack.c.0.s8 %v182
  %v199 = vunpack.c.0.s8 %v183
  %v200 = vunpack.c.0.s8 %v184
  %v201 = vunpack.c.0.s8 %v185
  %v202 = vunpack.c.0.s8 %v186
  %v203 = vunpack.c.0.s8 %v187
  %v204 = vcvt.s32.f32 %v188
  %v205 = vcvt.s32.f32 %v189
  %v206 = vcvt.s32.f32 %v190
  %v207 = vcvt.s32.f32 %v191
  %v208 = vcvt.s32.f32 %v192
  %v209 = vcvt.s32.f32 %v193
  %v210 = vcvt.s32.f32 %v194
  %v211 = vcvt.s32.f32 %v195
  %v212 = vcvt.s32.f32 %v196
  %v213 = vcvt.s32.f32 %v197
  %v214 = vcvt.s32.f32 %v198
  %v215 = vcvt.s32.f32 %v199
  %v216 = vcvt.s32.f32 %v200
  %v217 = vcvt.s32.f32 %v201
  %v218 = vcvt.s32.f32 %v202
  %v219 = vcvt.s32.f32 %v203
  %vm220 = vcmp.gt.f32.partialorder %v204, 0.0
  %vm221 = vcmp.gt.f32.partialorder %v205, 0.0
  %vm222 = vcmp.gt.f32.partialorder %v206, 0.0
  %vm223 = vcmp.gt.f32.partialorder %v207, 0.0
  %vm224 = vcmp.gt.f32.partialorder %v208, 0.0
  %vm225 = vcmp.gt.f32.partialorder %v209, 0.0
  %vm226 = vcmp.gt.f32.partialorder %v210, 0.0
  %vm227 = vcmp.gt.f32.partialorder %v211, 0.0
  %vm228 = vcmp.gt.f32.partialorder %v212, 0.0
  %vm229 = vcmp.gt.f32.partialorder %v213, 0.0
  %vm230 = vcmp.gt.f32.partialorder %v214, 0.0
  %vm231 = vcmp.gt.f32.partialorder %v215, 0.0
  %vm232 = vcmp.gt.f32.partialorder %v216, 0.0
  %vm233 = vcmp.gt.f32.partialorder %v217, 0.0
  %vm234 = vcmp.gt.f32.partialorder %v218, 0.0
  %vm235 = vcmp.gt.f32.partialorder %v219, 0.0
  %v236 = vsel %vm220, %v156, -1e+30
  %v237 = vsel %vm221, %v157, -1e+30
  %v238 = vsel %vm222, %v158, -1e+30
  %v239 = vsel %vm223, %v159, -1e+30
  %v240 = vsel %vm224, %v160, -1e+30
  %v241 = vsel %vm225, %v161, -1e+30
  %v242 = vsel %vm226, %v162, -1e+30
  %v243 = vsel %vm227, %v163, -1e+30
  %v244 = vsel %vm228, %v164, -1e+30
  %v245 = vsel %vm229, %v165, -1e+30
  %v246 = vsel %vm230, %v166, -1e+30
  %v247 = vsel %vm231, %v167, -1e+30
  %v248 = vsel %vm232, %v168, -1e+30
  %v249 = vsel %vm233, %v169, -1e+30
  %v250 = vsel %vm234, %v170, -1e+30
  %v251 = vsel %vm235, %v171, -1e+30
  %252 = vmax.xlane.f32.xlu0 %v236
  %v253 = vpop.xlane.xlu0 %252
  %254 = vmax.xlane.f32.xlu0 %v237
  %v255 = vpop.xlane.xlu0 %254
  %256 = vmax.xlane.f32.xlu0 %v238
  %v257 = vpop.xlane.xlu0 %256
  %258 = vmax.xlane.f32.xlu0 %v239
  %v259 = vpop.xlane.xlu0 %258
  %260 = vmax.xlane.f32.xlu0 %v240
  %v261 = vpop.xlane.xlu0 %260
  %262 = vmax.xlane.f32.xlu0 %v241
  %v263 = vpop.xlane.xlu0 %262
  %264 = vmax.xlane.f32.xlu0 %v242
  %v265 = vpop.xlane.xlu0 %264
  %266 = vmax.xlane.f32.xlu0 %v243
  %v267 = vpop.xlane.xlu0 %266
  %268 = vmax.xlane.f32.xlu0 %v244
  %v269 = vpop.xlane.xlu0 %268
  %270 = vmax.xlane.f32.xlu0 %v245
  %v271 = vpop.xlane.xlu0 %270
  %272 = vmax.xlane.f32.xlu0 %v246
  %v273 = vpop.xlane.xlu0 %272
  %274 = vmax.xlane.f32.xlu0 %v247
  %v275 = vpop.xlane.xlu0 %274
  %276 = vmax.xlane.f32.xlu0 %v248
  %v277 = vpop.xlane.xlu0 %276
  %278 = vmax.xlane.f32.xlu0 %v249
  %v279 = vpop.xlane.xlu0 %278
  %280 = vmax.xlane.f32.xlu0 %v250
  %v281 = vpop.xlane.xlu0 %280
  %282 = vmax.xlane.f32.xlu0 %v251
  %v283 = vpop.xlane.xlu0 %282
  %v284 = vsub.f32 %v236, %v253
  %v285 = vsub.f32 %v237, %v255
  %v286 = vsub.f32 %v238, %v257
  %v287 = vsub.f32 %v239, %v259
  %v288 = vsub.f32 %v240, %v261
  %v289 = vsub.f32 %v241, %v263
  %v290 = vsub.f32 %v242, %v265
  %v291 = vsub.f32 %v243, %v267
  %v292 = vsub.f32 %v244, %v269
  %v293 = vsub.f32 %v245, %v271
  %v294 = vsub.f32 %v246, %v273
  %v295 = vsub.f32 %v247, %v275
  %v296 = vsub.f32 %v248, %v277
  %v297 = vsub.f32 %v249, %v279
  %v298 = vsub.f32 %v250, %v281
  %v299 = vsub.f32 %v251, %v283
  %v300 = vmul.f32 %v284, 1.442695
  %v301 = vpow.pop %v300
  %v302 = vmul.f32 %v285, 1.442695
  %v303 = vpow.pop %v302
  %v304 = vmul.f32 %v286, 1.442695
  %v305 = vpow.pop %v304
  %v306 = vmul.f32 %v287, 1.442695
  %v307 = vpow.pop %v306
  %v308 = vmul.f32 %v288, 1.442695
  %v309 = vpow.pop %v308
  %v310 = vmul.f32 %v289, 1.442695
  %v311 = vpow.pop %v310
  %v312 = vmul.f32 %v290, 1.442695
  %v313 = vpow.pop %v312
  %v314 = vmul.f32 %v291, 1.442695
  %v315 = vpow.pop %v314
  %v316 = vmul.f32 %v292, 1.442695
  %v317 = vpow.pop %v316
  %v318 = vmul.f32 %v293, 1.442695
  %v319 = vpow.pop %v318
  %v320 = vmul.f32 %v294, 1.442695
  %v321 = vpow.pop %v320
  %v322 = vmul.f32 %v295, 1.442695
  %v323 = vpow.pop %v322
  %v324 = vmul.f32 %v296, 1.442695
  %v325 = vpow.pop %v324
  %v326 = vmul.f32 %v297, 1.442695
  %v327 = vpow.pop %v326
  %v328 = vmul.f32 %v298, 1.442695
  %v329 = vpow.pop %v328
  %v330 = vmul.f32 %v299, 1.442695
  %v331 = vpow.pop %v330
  %332 = vadd.xlane.f32.xlu0 %v301
  %v333 = vpop.xlane.xlu0 %332
  %334 = vadd.xlane.f32.xlu0 %v303
  %v335 = vpop.xlane.xlu0 %334
  %336 = vadd.xlane.f32.xlu0 %v305
  %v337 = vpop.xlane.xlu0 %336
  %338 = vadd.xlane.f32.xlu0 %v307
  %v339 = vpop.xlane.xlu0 %338
  %340 = vadd.xlane.f32.xlu0 %v309
  %v341 = vpop.xlane.xlu0 %340
  %342 = vadd.xlane.f32.xlu0 %v311
  %v343 = vpop.xlane.xlu0 %342
  %344 = vadd.xlane.f32.xlu0 %v313
  %v345 = vpop.xlane.xlu0 %344
  %346 = vadd.xlane.f32.xlu0 %v315
  %v347 = vpop.xlane.xlu0 %346
  %348 = vadd.xlane.f32.xlu0 %v317
  %v349 = vpop.xlane.xlu0 %348
  %350 = vadd.xlane.f32.xlu0 %v319
  %v351 = vpop.xlane.xlu0 %350
  %352 = vadd.xlane.f32.xlu0 %v321
  %v353 = vpop.xlane.xlu0 %352
  %354 = vadd.xlane.f32.xlu0 %v323
  %v355 = vpop.xlane.xlu0 %354
  %356 = vadd.xlane.f32.xlu0 %v325
  %v357 = vpop.xlane.xlu0 %356
  %358 = vadd.xlane.f32.xlu0 %v327
  %v359 = vpop.xlane.xlu0 %358
  %360 = vadd.xlane.f32.xlu0 %v329
  %v361 = vpop.xlane.xlu0 %360
  %362 = vadd.xlane.f32.xlu0 %v331
  %v363 = vpop.xlane.xlu0 %362
  %v364 = vrcp.pop %v333
  %v365 = vrcp.pop %v335
  %v366 = vrcp.pop %v337
  %v367 = vrcp.pop %v339
  %v368 = vrcp.pop %v341
  %v369 = vrcp.pop %v343
  %v370 = vrcp.pop %v345
  %v371 = vrcp.pop %v347
  %v372 = vrcp.pop %v349
  %v373 = vrcp.pop %v351
  %v374 = vrcp.pop %v353
  %v375 = vrcp.pop %v355
  %v376 = vrcp.pop %v357
  %v377 = vrcp.pop %v359
  %v378 = vrcp.pop %v361
  %v379 = vrcp.pop %v363
  %v380 = vmul.f32 %v301, %v364
  %v381 = vmul.f32 %v303, %v365
  %v382 = vmul.f32 %v305, %v366
  %v383 = vmul.f32 %v307, %v367
  %v384 = vmul.f32 %v309, %v368
  %v385 = vmul.f32 %v311, %v369
  %v386 = vmul.f32 %v313, %v370
  %v387 = vmul.f32 %v315, %v371
  %v388 = vmul.f32 %v317, %v372
  %v389 = vmul.f32 %v319, %v373
  %v390 = vmul.f32 %v321, %v374
  %v391 = vmul.f32 %v323, %v375
  %v392 = vmul.f32 %v325, %v376
  %v393 = vmul.f32 %v327, %v377
  %v394 = vmul.f32 %v329, %v378
  %v395 = vmul.f32 %v331, %v379
  %v396 = vpack.c.bf16 %v381, %v380
  %v397 = vpack.c.bf16 %v383, %v382
  %v398 = vpack.c.bf16 %v385, %v384
  %v399 = vpack.c.bf16 %v387, %v386
  %v400 = vpack.c.bf16 %v389, %v388
  %v401 = vpack.c.bf16 %v391, %v390
  %v402 = vpack.c.bf16 %v393, %v392
  %v403 = vpack.c.bf16 %v395, %v394
  %v404 = vld [vmem:[%s1] sm:$0xf]
  %v405 = vld [vmem:[%s1 + $0x4] sm:$0xf]
  %v406 = vld [vmem:[%s1 + $0x8] sm:$0xf]
  %v407 = vld [vmem:[%s1 + $0xc] sm:$0xf]
  %v408 = vld [vmem:[%s1 + $0x10] sm:$0xf]
  %v409 = vld [vmem:[%s1 + $0x14] sm:$0xf]
  %v410 = vld [vmem:[%s1 + $0x18] sm:$0xf]
  %v411 = vld [vmem:[%s1 + $0x1c] sm:$0xf]
  %v412 = vld [vmem:[%s1 + $0x20] sm:$0xf]
  %v413 = vld [vmem:[%s1 + $0x24] sm:$0xf]
  %v414 = vld [vmem:[%s1 + $0x28] sm:$0xf]
  %v415 = vld [vmem:[%s1 + $0x2c] sm:$0xf]
  %v416 = vld [vmem:[%s1 + $0x30] sm:$0xf]
  %v417 = vld [vmem:[%s1 + $0x34] sm:$0xf]
  %v418 = vld [vmem:[%s1 + $0x38] sm:$0xf]
  %v419 = vld [vmem:[%s1 + $0x3c] sm:$0xf]
  %v420 = vld [vmem:[%s4] sm:$0x1]
  %v422 = vlaneseq
  %v423 = vshrl.u32 %v422, 7
  %v424 = vsub.s32 0, %v423
  %v425 = vrot.slane %v420, %v424
  %v443 = vunpack.c.l.b16 %v404
  %v444 = vunpack.c.l.b16 %v405
  %v445 = vunpack.c.l.b16 %v406
  %v446 = vunpack.c.l.b16 %v407
  %v447 = vunpack.c.l.b16 %v408
  %v448 = vunpack.c.l.b16 %v409
  %v449 = vunpack.c.l.b16 %v410
  %v450 = vunpack.c.l.b16 %v411
  %v451 = vunpack.c.l.b16 %v412
  %v452 = vunpack.c.l.b16 %v413
  %v453 = vunpack.c.l.b16 %v414
  %v454 = vunpack.c.l.b16 %v415
  %v455 = vunpack.c.l.b16 %v416
  %v456 = vunpack.c.l.b16 %v417
  %v457 = vunpack.c.l.b16 %v418
  %v458 = vunpack.c.l.b16 %v419
  %v459 = vpack.c.b16 %v444, %v443
  %v460 = vpack.c.b16 %v446, %v445
  %v461 = vpack.c.b16 %v448, %v447
  %v462 = vpack.c.b16 %v450, %v449
  %v463 = vpack.c.b16 %v452, %v451
  %v464 = vpack.c.b16 %v454, %v453
  %v465 = vpack.c.b16 %v456, %v455
  %v466 = vpack.c.b16 %v458, %v457
  %475 = vmatprep.subr.bf16.mxu0 0
  %476 = vmatpush1.bf16.msra.mxu0 %v466
  %477 = vmatprep.subr.bf16.mxu0 0
  %478 = vmatpush1.bf16.msra.mxu0 %v465
  %479 = vmatprep.subr.bf16.mxu0 0
  %480 = vmatpush1.bf16.msra.mxu0 %v464
  %481 = vmatprep.subr.bf16.mxu0 0
  %482 = vmatpush1.bf16.msra.mxu0 %v463
  %483 = vmatprep.subr.bf16.mxu0 0
  %484 = vmatpush1.bf16.msra.mxu0 %v462
  %485 = vmatprep.subr.bf16.mxu0 0
  %486 = vmatpush1.bf16.msra.mxu0 %v461
  %487 = vmatprep.subr.bf16.mxu0 0
  %488 = vmatpush1.bf16.msra.mxu0 %v460
  %489 = vmatprep.subr.bf16.mxu0 0
  %490 = vmatpush1.bf16.msra.mxu0 %v459
  %491 = vmatprep.subr.bf16.mxu0 0
  %492 = vmatpush2.bf16.msra.mxu0 0
  %493 = vmatprep.subr.bf16.mxu0 0
  %494 = vmatpush2.bf16.msra.mxu0 0
  %495 = vmatprep.subr.bf16.mxu0 0
  %496 = vmatpush2.bf16.msra.mxu0 0
  %497 = vmatprep.subr.bf16.mxu0 0
  %498 = vmatpush2.bf16.msra.mxu0 0
  %499 = vmatprep.subr.bf16.mxu0 0
  %500 = vmatpush2.bf16.msra.mxu0 0
  %501 = vmatprep.subr.bf16.mxu0 0
  %502 = vmatpush2.bf16.msra.mxu0 0
  %503 = vmatprep.subr.bf16.mxu0 0
  %504 = vmatpush2.bf16.msra.mxu0 0
  %505 = vmatprep.subr.bf16.mxu0 0
  %506 = vmatpush2.bf16.msra.mxu0 0
  %507 = vmatprep.mubr.bf16.mxu0 0
  %508 = vmatmul.mubr.bf16.gmra.mxu0 %v396
  %v509 = vpop.f32.mrf.mxu0
  %v510 = vadd.f32 %v425, %v509
  %v511 = vpop.f32.mrf.mxu0
  %v512 = vpop.f32.mrf.mxu0
  %v513 = vadd.f32 %v425, %v512
  %v514 = vpop.f32.mrf.mxu0
  %515 = vmatprep.mubr.bf16.mxu0 0
  %516 = vmatmul.mubr.bf16.gmra.mxu0 %v397
  %v517 = vpop.f32.mrf.mxu0
  %v518 = vadd.f32 %v425, %v517
  %v519 = vpop.f32.mrf.mxu0
  %v520 = vpop.f32.mrf.mxu0
  %v521 = vadd.f32 %v425, %v520
  %v522 = vpop.f32.mrf.mxu0
  %523 = vmatprep.mubr.bf16.mxu0 0
  %524 = vmatmul.mubr.bf16.gmra.mxu0 %v398
  %v525 = vpop.f32.mrf.mxu0
  %v526 = vadd.f32 %v425, %v525
  %v527 = vpop.f32.mrf.mxu0
  %v528 = vpop.f32.mrf.mxu0
  %v529 = vadd.f32 %v425, %v528
  %v530 = vpop.f32.mrf.mxu0
  %531 = vmatprep.mubr.bf16.mxu0 0
  %532 = vmatmul.mubr.bf16.gmra.mxu0 %v399
  %v533 = vpop.f32.mrf.mxu0
  %v534 = vadd.f32 %v425, %v533
  %v535 = vpop.f32.mrf.mxu0
  %v536 = vpop.f32.mrf.mxu0
  %v537 = vadd.f32 %v425, %v536
  %v538 = vpop.f32.mrf.mxu0
  %539 = vmatprep.mubr.bf16.mxu0 0
  %540 = vmatmul.mubr.bf16.gmra.mxu0 %v400
  %v541 = vpop.f32.mrf.mxu0
  %v542 = vadd.f32 %v425, %v541
  %v543 = vpop.f32.mrf.mxu0
  %v544 = vpop.f32.mrf.mxu0
  %v545 = vadd.f32 %v425, %v544
  %v546 = vpop.f32.mrf.mxu0
  %547 = vmatprep.mubr.bf16.mxu0 0
  %548 = vmatmul.mubr.bf16.gmra.mxu0 %v401
  %v549 = vpop.f32.mrf.mxu0
  %v550 = vadd.f32 %v425, %v549
  %v551 = vpop.f32.mrf.mxu0
  %v552 = vpop.f32.mrf.mxu0
  %v553 = vadd.f32 %v425, %v552
  %v554 = vpop.f32.mrf.mxu0
  %555 = vmatprep.mubr.bf16.mxu0 0
  %556 = vmatmul.mubr.bf16.gmra.mxu0 %v402
  %v557 = vpop.f32.mrf.mxu0
  %v558 = vadd.f32 %v425, %v557
  %v559 = vpop.f32.mrf.mxu0
  %v560 = vpop.f32.mrf.mxu0
  %v561 = vadd.f32 %v425, %v560
  %v562 = vpop.f32.mrf.mxu0
  %563 = vmatprep.mubr.bf16.mxu0 0
  %564 = vmatmul.mubr.bf16.gmra.mxu0 %v403
  %v565 = vpop.f32.mrf.mxu0
  %v566 = vadd.f32 %v425, %v565
  %v567 = vpop.f32.mrf.mxu0
  %v568 = vpop.f32.mrf.mxu0
  %v569 = vadd.f32 %v425, %v568
  %v570 = vpop.f32.mrf.mxu0
  %571 = vdwg.mxu0
  %v572 = vmax.f32 %v510, 0.0
  %v573 = vmax.f32 %v513, 0.0
  %v574 = vmax.f32 %v518, 0.0
  %v575 = vmax.f32 %v521, 0.0
  %v576 = vmax.f32 %v526, 0.0
  %v577 = vmax.f32 %v529, 0.0
  %v578 = vmax.f32 %v534, 0.0
  %v579 = vmax.f32 %v537, 0.0
  %v580 = vmax.f32 %v542, 0.0
  %v581 = vmax.f32 %v545, 0.0
  %v582 = vmax.f32 %v550, 0.0
  %v583 = vmax.f32 %v553, 0.0
  %v584 = vmax.f32 %v558, 0.0
  %v585 = vmax.f32 %v561, 0.0
  %v586 = vmax.f32 %v566, 0.0
  %v587 = vmax.f32 %v569, 0.0
  %v588 = vpack.c.bf16 %v573, %v572
  %v589 = vpack.c.bf16 %v575, %v574
  %v590 = vpack.c.bf16 %v577, %v576
  %v591 = vpack.c.bf16 %v579, %v578
  %v592 = vpack.c.bf16 %v581, %v580
  %v593 = vpack.c.bf16 %v583, %v582
  %v594 = vpack.c.bf16 %v585, %v584
  %v595 = vpack.c.bf16 %v587, %v586
  %v604 = vunpack.c.l.b16 %v588
  %v605 = vunpack.c.h.b16 %v588
  %v606 = vunpack.c.l.b16 %v589
  %v607 = vunpack.c.h.b16 %v589
  %v608 = vunpack.c.l.b16 %v590
  %v609 = vunpack.c.h.b16 %v590
  %v610 = vunpack.c.l.b16 %v591
  %v611 = vunpack.c.h.b16 %v591
  %v612 = vunpack.c.l.b16 %v592
  %v613 = vunpack.c.h.b16 %v592
  %v614 = vunpack.c.l.b16 %v593
  %v615 = vunpack.c.h.b16 %v593
  %v616 = vunpack.c.l.b16 %v594
  %v617 = vunpack.c.h.b16 %v594
  %v618 = vunpack.c.l.b16 %v595
  %v619 = vunpack.c.h.b16 %v595
  %v620 = vpack.c.b16 %v604, %v604
  %v621 = vpack.c.b16 %v605, %v605
  %v622 = vpack.c.b16 %v606, %v606
  %v623 = vpack.c.b16 %v607, %v607
  %v624 = vpack.c.b16 %v608, %v608
  %v625 = vpack.c.b16 %v609, %v609
  %v626 = vpack.c.b16 %v610, %v610
  %v627 = vpack.c.b16 %v611, %v611
  %v628 = vpack.c.b16 %v612, %v612
  %v629 = vpack.c.b16 %v613, %v613
  %v630 = vpack.c.b16 %v614, %v614
  %v631 = vpack.c.b16 %v615, %v615
  %v632 = vpack.c.b16 %v616, %v616
  %v633 = vpack.c.b16 %v617, %v617
  %v634 = vpack.c.b16 %v618, %v618
  %v635 = vpack.c.b16 %v619, %v619
  %652 = vst [vmem:[%s5] sm:$0xf] %v620
  %653 = vst [vmem:[%s5 + $0x4] sm:$0xf] %v621
  %654 = vst [vmem:[%s5 + $0x8] sm:$0xf] %v622
  %655 = vst [vmem:[%s5 + $0xc] sm:$0xf] %v623
  %656 = vst [vmem:[%s5 + $0x10] sm:$0xf] %v624
  %657 = vst [vmem:[%s5 + $0x14] sm:$0xf] %v625
  %658 = vst [vmem:[%s5 + $0x18] sm:$0xf] %v626
  %659 = vst [vmem:[%s5 + $0x1c] sm:$0xf] %v627
  %660 = vst [vmem:[%s5 + $0x20] sm:$0xf] %v628
  %661 = vst [vmem:[%s5 + $0x24] sm:$0xf] %v629
  %662 = vst [vmem:[%s5 + $0x28] sm:$0xf] %v630
  %663 = vst [vmem:[%s5 + $0x2c] sm:$0xf] %v631
  %664 = vst [vmem:[%s5 + $0x30] sm:$0xf] %v632
  %665 = vst [vmem:[%s5 + $0x34] sm:$0xf] %v633
  %666 = vst [vmem:[%s5 + $0x38] sm:$0xf] %v634
  %667 = vst [vmem:[%s5 + $0x3c] sm:$0xf] %v635
  // Predicated region
  $region22: #{anomalydae_forward.4} parent=0 // pred_check
    _
  $region23: #{anomalydae_forward.4} parent=0 // pred_check_branch
    %669 = sbr.rel (0) target = $region25
  $region24: #{anomalydae_forward.4} parent=0 // pred_region
    _
  $region25: #{anomalydae_forward.4} parent=0 // pred_fallthru
    _
  // Predicated region
  $region26: #{anomalydae_forward.4} parent=0 // pred_check
    _
  $region27: #{anomalydae_forward.4} parent=0 // pred_check_branch
    %671 = sbr.rel (0) target = $region29
  $region28: #{anomalydae_forward.4} parent=0 // pred_region
    _
  $region29: #{anomalydae_forward.4} parent=0 // pred_fallthru
    _

// kernel: anomalydae_forward.3
$region0: #{anomalydae_forward.3}
  #allocation0 [shape = 'u32[]', space=smem, size = 0x4, offset = 0x4, fixed_abs, tag = 'smem constant byte address 0x4 - core index']
  #allocation1 [shape = 'u32[144,128]{1,0:T(1,128)}', space=vmem, size = 0x12000, scoped, tag = 'internal scratch']
  %s0 = inlined_call_operand.vmem [shape: f32[128,128], index: 0, kind: input, shape index: {}]
  %s1 = inlined_call_operand.vmem [shape: f32[128,128], index: 1, kind: input, shape index: {}]
  %s2 = inlined_call_operand.vmem [shape: f32[1,128], index: 2, kind: input, shape index: {}]
  %s3 = inlined_call_operand.vmem [shape: f32[128,128], index: 3, kind: input, shape index: {}]
  %s4 = inlined_call_operand.vmem [shape: f32[1,128], index: 4, kind: input, shape index: {}]
  %s5 = inlined_call_operand.vmem [shape: f32[1,128], index: 5, kind: input, shape index: {}]
  %s6 = inlined_call_operand.vmem [shape: f32[128,128], index: 6, kind: input, shape index: {}]
  %s7 = inlined_call_operand.vmem [shape: f32[128,1], index: 7, kind: input, shape index: {}]
  %s8 = inlined_call_operand.vmem [shape: f32[128,128], index: 8, kind: input, shape index: {}]
  %s9 = inlined_call_operand.vmem [shape: f32[128,1], index: 9, kind: input, shape index: {}]
  %s10 = inlined_call_operand.vmem [shape: bf16[128,128], index: 10, kind: output, shape index: {0}]
  %s11 = inlined_call_operand.vmem [shape: f32[1,128], index: 11, kind: output, shape index: {1}]
  %s12 = inlined_call_operand.vmem [shape: f32[128,1], index: 12, kind: output, shape index: {2}]
  %s13 = inlined_call_operand.vmem [shape: bf16[128,128], index: 13, kind: output, shape index: {3}]
  %14 = xla_tuple %s10, %s11, %s12, %s13
  %s15 = sld [smem:[#allocation0]]
  $region74: #{anomalydae_forward.3} parent=0
    _
  %s17 = ssub.s32 1, %s15
  %s18 = scalar_select 0, %s17, %s15
  // Predicated region
  $region2: #{anomalydae_forward.3} parent=0 // pred_check
    _
  $region3: #{anomalydae_forward.3} parent=0 // pred_check_branch
    %20 = sbr.rel (0) target = $region5
  $region4: #{anomalydae_forward.3} parent=0 // pred_region
    _
  $region5: #{anomalydae_forward.3} parent=0 // pred_fallthru
    _
  // Predicated region
  $region6: #{anomalydae_forward.3} parent=0 // pred_check
    _
  $region7: #{anomalydae_forward.3} parent=0 // pred_check_branch
    %22 = sbr.rel (0) target = $region9
  $region8: #{anomalydae_forward.3} parent=0 // pred_region
    _
  $region9: #{anomalydae_forward.3} parent=0 // pred_fallthru
    _
  // Predicated region
  $region10: #{anomalydae_forward.3} parent=0 // pred_check
    _
  $region11: #{anomalydae_forward.3} parent=0 // pred_check_branch
    %24 = sbr.rel (0) target = $region13
  $region12: #{anomalydae_forward.3} parent=0 // pred_region
    _
  $region13: #{anomalydae_forward.3} parent=0 // pred_fallthru
    _
  // Predicated region
  $region14: #{anomalydae_forward.3} parent=0 // pred_check
    _
  $region15: #{anomalydae_forward.3} parent=0 // pred_check_branch
    %26 = sbr.rel (0) target = $region17
  $region16: #{anomalydae_forward.3} parent=0 // pred_region
    _
  $region17: #{anomalydae_forward.3} parent=0 // pred_fallthru
    _
  // Predicated region
  $region18: #{anomalydae_forward.3} parent=0 // pred_check
    _
  $region19: #{anomalydae_forward.3} parent=0 // pred_check_branch
    %28 = sbr.rel (0) target = $region21
  $region20: #{anomalydae_forward.3} parent=0 // pred_region
    _
  $region21: #{anomalydae_forward.3} parent=0 // pred_fallthru
    _
  // Predicated region
  $region22: #{anomalydae_forward.3} parent=0 // pred_check
    _
  $region23: #{anomalydae_forward.3} parent=0 // pred_check_branch
    %30 = sbr.rel (0) target = $region25
  $region24: #{anomalydae_forward.3} parent=0 // pred_region
    _
  $region25: #{anomalydae_forward.3} parent=0 // pred_fallthru
    _
  // Predicated region
  $region26: #{anomalydae_forward.3} parent=0 // pred_check
    _
  $region27: #{anomalydae_forward.3} parent=0 // pred_check_branch
    %32 = sbr.rel (0) target = $region29
  $region28: #{anomalydae_forward.3} parent=0 // pred_region
    _
  $region29: #{anomalydae_forward.3} parent=0 // pred_fallthru
    _
  // Predicated region
  $region30: #{anomalydae_forward.3} parent=0 // pred_check
    _
  $region31: #{anomalydae_forward.3} parent=0 // pred_check_branch
    %34 = sbr.rel (0) target = $region33
  $region32: #{anomalydae_forward.3} parent=0 // pred_region
    _
  $region33: #{anomalydae_forward.3} parent=0 // pred_fallthru
    _
  // Predicated region
  $region34: #{anomalydae_forward.3} parent=0 // pred_check
    _
  $region35: #{anomalydae_forward.3} parent=0 // pred_check_branch
    %36 = sbr.rel (0) target = $region37
  $region36: #{anomalydae_forward.3} parent=0 // pred_region
    _
  $region37: #{anomalydae_forward.3} parent=0 // pred_fallthru
    _
  // Predicated region
  $region38: #{anomalydae_forward.3} parent=0 // pred_check
    _
  $region39: #{anomalydae_forward.3} parent=0 // pred_check_branch
    %38 = sbr.rel (0) target = $region41
  $region40: #{anomalydae_forward.3} parent=0 // pred_region
    _
  $region41: #{anomalydae_forward.3} parent=0 // pred_fallthru
    _
  %v39 = vld [vmem:[%s0] sm:$0xff]
  %v40 = vld [vmem:[%s0 + $0x8] sm:$0xff]
  %v41 = vld [vmem:[%s0 + $0x10] sm:$0xff]
  %v42 = vld [vmem:[%s0 + $0x18] sm:$0xff]
  %v43 = vld [vmem:[%s0 + $0x20] sm:$0xff]
  %v44 = vld [vmem:[%s0 + $0x28] sm:$0xff]
  %v45 = vld [vmem:[%s0 + $0x30] sm:$0xff]
  %v46 = vld [vmem:[%s0 + $0x38] sm:$0xff]
  %v47 = vld [vmem:[%s0 + $0x40] sm:$0xff]
  %v48 = vld [vmem:[%s0 + $0x48] sm:$0xff]
  %v49 = vld [vmem:[%s0 + $0x50] sm:$0xff]
  %v50 = vld [vmem:[%s0 + $0x58] sm:$0xff]
  %v51 = vld [vmem:[%s0 + $0x60] sm:$0xff]
  %v52 = vld [vmem:[%s0 + $0x68] sm:$0xff]
  %v53 = vld [vmem:[%s0 + $0x70] sm:$0xff]
  %v54 = vld [vmem:[%s0 + $0x78] sm:$0xff]
  %v55 = vld [vmem:[%s1] sm:$0xff]
  %v56 = vld [vmem:[%s1 + $0x8] sm:$0xff]
  %v57 = vld [vmem:[%s1 + $0x10] sm:$0xff]
  %v58 = vld [vmem:[%s1 + $0x18] sm:$0xff]
  %v59 = vld [vmem:[%s1 + $0x20] sm:$0xff]
  %v60 = vld [vmem:[%s1 + $0x28] sm:$0xff]
  %v61 = vld [vmem:[%s1 + $0x30] sm:$0xff]
  %v62 = vld [vmem:[%s1 + $0x38] sm:$0xff]
  %v63 = vld [vmem:[%s1 + $0x40] sm:$0xff]
  %v64 = vld [vmem:[%s1 + $0x48] sm:$0xff]
  %v65 = vld [vmem:[%s1 + $0x50] sm:$0xff]
  %v66 = vld [vmem:[%s1 + $0x58] sm:$0xff]
  %v67 = vld [vmem:[%s1 + $0x60] sm:$0xff]
  %v68 = vld [vmem:[%s1 + $0x68] sm:$0xff]
  %v69 = vld [vmem:[%s1 + $0x70] sm:$0xff]
  %v70 = vld [vmem:[%s1 + $0x78] sm:$0xff]
  %v71 = vld [vmem:[%s2] sm:$0x1]
  %v73 = vlaneseq
  %v74 = vshrl.u32 %v73, 7
  %v75 = vsub.s32 0, %v74
  %v76 = vrot.slane %v71, %v75
  %78 = vmatprep.subr.mxu0 0.0
  %79 = vmatpush1.msra.mxu0 %v70
  %80 = vmatprep.subr.mxu0 0.0
  %81 = vmatpush1.msra.mxu0 %v69
  %82 = vmatprep.subr.mxu0 0.0
  %83 = vmatpush1.msra.mxu0 %v68
  %84 = vmatprep.subr.mxu0 0.0
  %85 = vmatpush1.msra.mxu0 %v67
  %86 = vmatprep.subr.mxu0 0.0
  %87 = vmatpush1.msra.mxu0 %v66
  %88 = vmatprep.subr.mxu0 0.0
  %89 = vmatpush1.msra.mxu0 %v65
  %90 = vmatprep.subr.mxu0 0.0
  %91 = vmatpush1.msra.mxu0 %v64
  %92 = vmatprep.subr.mxu0 0.0
  %93 = vmatpush1.msra.mxu0 %v63
  %94 = vmatprep.subr.mxu0 0.0
  %95 = vmatpush1.msra.mxu0 %v62
  %96 = vmatprep.subr.mxu0 0.0
  %97 = vmatpush1.msra.mxu0 %v61
  %98 = vmatprep.subr.mxu0 0.0
  %99 = vmatpush1.msra.mxu0 %v60
  %100 = vmatprep.subr.mxu0 0.0
  %101 = vmatpush1.msra.mxu0 %v59
  %102 = vmatprep.subr.mxu0 0.0
  %103 = vmatpush1.msra.mxu0 %v58
  %104 = vmatprep.subr.mxu0 0.0
  %105 = vmatpush1.msra.mxu0 %v57
  %106 = vmatprep.subr.mxu0 0.0
  %107 = vmatpush1.msra.mxu0 %v56
  %108 = vmatprep.subr.mxu0 0.0
  %109 = vmatpush1.msra.mxu0 %v55
  %110 = vmatprep.subr.mxu0 0.0
  %111 = vmatpush2.msra.mxu0 0.0
  %112 = vmatprep.subr.mxu0 0.0
  %113 = vmatpush2.msra.mxu0 0.0
  %114 = vmatprep.subr.mxu0 0.0
  %115 = vmatpush2.msra.mxu0 0.0
  %116 = vmatprep.subr.mxu0 0.0
  %117 = vmatpush2.msra.mxu0 0.0
  %118 = vmatprep.subr.mxu0 0.0
  %119 = vmatpush2.msra.mxu0 0.0
  %120 = vmatprep.subr.mxu0 0.0
  %121 = vmatpush2.msra.mxu0 0.0
  %122 = vmatprep.subr.mxu0 0.0
  %123 = vmatpush2.msra.mxu0 0.0
  %124 = vmatprep.subr.mxu0 0.0
  %125 = vmatpush2.msra.mxu0 0.0
  %126 = vmatprep.subr.mxu0 0.0
  %127 = vmatpush2.msra.mxu0 0.0
  %128 = vmatprep.subr.mxu0 0.0
  %129 = vmatpush2.msra.mxu0 0.0
  %130 = vmatprep.subr.mxu0 0.0
  %131 = vmatpush2.msra.mxu0 0.0
  %132 = vmatprep.subr.mxu0 0.0
  %133 = vmatpush2.msra.mxu0 0.0
  %134 = vmatprep.subr.mxu0 0.0
  %135 = vmatpush2.msra.mxu0 0.0
  %136 = vmatprep.subr.mxu0 0.0
  %137 = vmatpush2.msra.mxu0 0.0
  %138 = vmatprep.subr.mxu0 0.0
  %139 = vmatpush2.msra.mxu0 0.0
  %140 = vmatprep.subr.mxu0 0.0
  %141 = vmatpush2.msra.mxu0 0.0
  %142 = vmatprep.mubr.f32.mxu0 0.0
  %143 = vmatmul.mubr.f32.gmra.mxu0 %v39
  %v144 = vpop.f32.mrf.mxu0
  %v145 = vadd.f32 %v76, %v144
  %v146 = vpop.f32.mrf.mxu0
  %147 = vmatprep.mubr.f32.mxu0 0.0
  %148 = vmatmul.mubr.f32.gmra.mxu0 %v40
  %v149 = vpop.f32.mrf.mxu0
  %v150 = vadd.f32 %v76, %v149
  %v151 = vpop.f32.mrf.mxu0
  %152 = vmatprep.mubr.f32.mxu0 0.0
  %153 = vmatmul.mubr.f32.gmra.mxu0 %v41
  %v154 = vpop.f32.mrf.mxu0
  %v155 = vadd.f32 %v76, %v154
  %v156 = vpop.f32.mrf.mxu0
  %157 = vmatprep.mubr.f32.mxu0 0.0
  %158 = vmatmul.mubr.f32.gmra.mxu0 %v42
  %v159 = vpop.f32.mrf.mxu0
  %v160 = vadd.f32 %v76, %v159
  %v161 = vpop.f32.mrf.mxu0
  %162 = vmatprep.mubr.f32.mxu0 0.0
  %163 = vmatmul.mubr.f32.gmra.mxu0 %v43
  %v164 = vpop.f32.mrf.mxu0
  %v165 = vadd.f32 %v76, %v164
  %v166 = vpop.f32.mrf.mxu0
  %167 = vmatprep.mubr.f32.mxu0 0.0
  %168 = vmatmul.mubr.f32.gmra.mxu0 %v44
  %v169 = vpop.f32.mrf.mxu0
  %v170 = vadd.f32 %v76, %v169
  %v171 = vpop.f32.mrf.mxu0
  %172 = vmatprep.mubr.f32.mxu0 0.0
  %173 = vmatmul.mubr.f32.gmra.mxu0 %v45
  %v174 = vpop.f32.mrf.mxu0
  %v175 = vadd.f32 %v76, %v174
  %v176 = vpop.f32.mrf.mxu0
  %177 = vmatprep.mubr.f32.mxu0 0.0
  %178 = vmatmul.mubr.f32.gmra.mxu0 %v46
  %v179 = vpop.f32.mrf.mxu0
  %v180 = vadd.f32 %v76, %v179
  %v181 = vpop.f32.mrf.mxu0
  %182 = vmatprep.mubr.f32.mxu0 0.0
  %183 = vmatmul.mubr.f32.gmra.mxu0 %v47
  %v184 = vpop.f32.mrf.mxu0
  %v185 = vadd.f32 %v76, %v184
  %v186 = vpop.f32.mrf.mxu0
  %187 = vmatprep.mubr.f32.mxu0 0.0
  %188 = vmatmul.mubr.f32.gmra.mxu0 %v48
  %v189 = vpop.f32.mrf.mxu0
  %v190 = vadd.f32 %v76, %v189
  %v191 = vpop.f32.mrf.mxu0
  %192 = vmatprep.mubr.f32.mxu0 0.0
  %193 = vmatmul.mubr.f32.gmra.mxu0 %v49
  %v194 = vpop.f32.mrf.mxu0
  %v195 = vadd.f32 %v76, %v194
  %v196 = vpop.f32.mrf.mxu0
  %197 = vmatprep.mubr.f32.mxu0 0.0
  %198 = vmatmul.mubr.f32.gmra.mxu0 %v50
  %v199 = vpop.f32.mrf.mxu0
  %v200 = vadd.f32 %v76, %v199
  %v201 = vpop.f32.mrf.mxu0
  %202 = vmatprep.mubr.f32.mxu0 0.0
  %203 = vmatmul.mubr.f32.gmra.mxu0 %v51
  %v204 = vpop.f32.mrf.mxu0
  %v205 = vadd.f32 %v76, %v204
  %v206 = vpop.f32.mrf.mxu0
  %207 = vmatprep.mubr.f32.mxu0 0.0
  %208 = vmatmul.mubr.f32.gmra.mxu0 %v52
  %v209 = vpop.f32.mrf.mxu0
  %v210 = vadd.f32 %v76, %v209
  %v211 = vpop.f32.mrf.mxu0
  %212 = vmatprep.mubr.f32.mxu0 0.0
  %213 = vmatmul.mubr.f32.gmra.mxu0 %v53
  %v214 = vpop.f32.mrf.mxu0
  %v215 = vadd.f32 %v76, %v214
  %v216 = vpop.f32.mrf.mxu0
  %217 = vmatprep.mubr.f32.mxu0 0.0
  %218 = vmatmul.mubr.f32.gmra.mxu0 %v54
  %v219 = vpop.f32.mrf.mxu0
  %v220 = vadd.f32 %v76, %v219
  %v221 = vpop.f32.mrf.mxu0
  %222 = vdwg.mxu0
  %v223 = vmax.f32 %v145, 0.0
  %v224 = vmax.f32 %v150, 0.0
  %v225 = vmax.f32 %v155, 0.0
  %v226 = vmax.f32 %v160, 0.0
  %v227 = vmax.f32 %v165, 0.0
  %v228 = vmax.f32 %v170, 0.0
  %v229 = vmax.f32 %v175, 0.0
  %v230 = vmax.f32 %v180, 0.0
  %v231 = vmax.f32 %v185, 0.0
  %v232 = vmax.f32 %v190, 0.0
  %v233 = vmax.f32 %v195, 0.0
  %v234 = vmax.f32 %v200, 0.0
  %v235 = vmax.f32 %v205, 0.0
  %v236 = vmax.f32 %v210, 0.0
  %v237 = vmax.f32 %v215, 0.0
  %v238 = vmax.f32 %v220, 0.0
  %v239 = vld [vmem:[%s3] sm:$0xff]
  %v240 = vld [vmem:[%s3 + $0x8] sm:$0xff]
  %v241 = vld [vmem:[%s3 + $0x10] sm:$0xff]
  %v242 = vld [vmem:[%s3 + $0x18] sm:$0xff]
  %v243 = vld [vmem:[%s3 + $0x20] sm:$0xff]
  %v244 = vld [vmem:[%s3 + $0x28] sm:$0xff]
  %v245 = vld [vmem:[%s3 + $0x30] sm:$0xff]
  %v246 = vld [vmem:[%s3 + $0x38] sm:$0xff]
  %v247 = vld [vmem:[%s3 + $0x40] sm:$0xff]
  %v248 = vld [vmem:[%s3 + $0x48] sm:$0xff]
  %v249 = vld [vmem:[%s3 + $0x50] sm:$0xff]
  %v250 = vld [vmem:[%s3 + $0x58] sm:$0xff]
  %v251 = vld [vmem:[%s3 + $0x60] sm:$0xff]
  %v252 = vld [vmem:[%s3 + $0x68] sm:$0xff]
  %v253 = vld [vmem:[%s3 + $0x70] sm:$0xff]
  %v254 = vld [vmem:[%s3 + $0x78] sm:$0xff]
  %255 = vmatprep.subr.mxu0 0.0
  %256 = vmatpush1.msra.mxu0 %v254
  %257 = vmatprep.subr.mxu0 0.0
  %258 = vmatpush1.msra.mxu0 %v253
  %259 = vmatprep.subr.mxu0 0.0
  %260 = vmatpush1.msra.mxu0 %v252
  %261 = vmatprep.subr.mxu0 0.0
  %262 = vmatpush1.msra.mxu0 %v251
  %263 = vmatprep.subr.mxu0 0.0
  %264 = vmatpush1.msra.mxu0 %v250
  %265 = vmatprep.subr.mxu0 0.0
  %266 = vmatpush1.msra.mxu0 %v249
  %267 = vmatprep.subr.mxu0 0.0
  %268 = vmatpush1.msra.mxu0 %v248
  %269 = vmatprep.subr.mxu0 0.0
  %270 = vmatpush1.msra.mxu0 %v247
  %271 = vmatprep.subr.mxu0 0.0
  %272 = vmatpush1.msra.mxu0 %v246
  %273 = vmatprep.subr.mxu0 0.0
  %274 = vmatpush1.msra.mxu0 %v245
  %275 = vmatprep.subr.mxu0 0.0
  %276 = vmatpush1.msra.mxu0 %v244
  %277 = vmatprep.subr.mxu0 0.0
  %278 = vmatpush1.msra.mxu0 %v243
  %279 = vmatprep.subr.mxu0 0.0
  %280 = vmatpush1.msra.mxu0 %v242
  %281 = vmatprep.subr.mxu0 0.0
  %282 = vmatpush1.msra.mxu0 %v241
  %283 = vmatprep.subr.mxu0 0.0
  %284 = vmatpush1.msra.mxu0 %v240
  %285 = vmatprep.subr.mxu0 0.0
  %286 = vmatpush1.msra.mxu0 %v239
  %287 = vmatprep.subr.mxu0 0.0
  %288 = vmatpush2.msra.mxu0 0.0
  %289 = vmatprep.subr.mxu0 0.0
  %290 = vmatpush2.msra.mxu0 0.0
  %291 = vmatprep.subr.mxu0 0.0
  %292 = vmatpush2.msra.mxu0 0.0
  %293 = vmatprep.subr.mxu0 0.0
  %294 = vmatpush2.msra.mxu0 0.0
  %295 = vmatprep.subr.mxu0 0.0
  %296 = vmatpush2.msra.mxu0 0.0
  %297 = vmatprep.subr.mxu0 0.0
  %298 = vmatpush2.msra.mxu0 0.0
  %299 = vmatprep.subr.mxu0 0.0
  %300 = vmatpush2.msra.mxu0 0.0
  %301 = vmatprep.subr.mxu0 0.0
  %302 = vmatpush2.msra.mxu0 0.0
  %303 = vmatprep.subr.mxu0 0.0
  %304 = vmatpush2.msra.mxu0 0.0
  %305 = vmatprep.subr.mxu0 0.0
  %306 = vmatpush2.msra.mxu0 0.0
  %307 = vmatprep.subr.mxu0 0.0
  %308 = vmatpush2.msra.mxu0 0.0
  %309 = vmatprep.subr.mxu0 0.0
  %310 = vmatpush2.msra.mxu0 0.0
  %311 = vmatprep.subr.mxu0 0.0
  %312 = vmatpush2.msra.mxu0 0.0
  %313 = vmatprep.subr.mxu0 0.0
  %314 = vmatpush2.msra.mxu0 0.0
  %315 = vmatprep.subr.mxu0 0.0
  %316 = vmatpush2.msra.mxu0 0.0
  %317 = vmatprep.subr.mxu0 0.0
  %318 = vmatpush2.msra.mxu0 0.0
  %319 = vmatprep.mubr.f32.mxu0 0.0
  %320 = vmatmul.mubr.f32.gmra.mxu0 %v223
  %v321 = vpop.f32.mrf.mxu0
  %v322 = vadd.f32 0.0, %v321
  %v323 = vpop.f32.mrf.mxu0
  %324 = vmatprep.mubr.f32.mxu0 0.0
  %325 = vmatmul.mubr.f32.gmra.mxu0 %v224
  %v326 = vpop.f32.mrf.mxu0
  %v327 = vadd.f32 0.0, %v326
  %v328 = vpop.f32.mrf.mxu0
  %329 = vmatprep.mubr.f32.mxu0 0.0
  %330 = vmatmul.mubr.f32.gmra.mxu0 %v225
  %v331 = vpop.f32.mrf.mxu0
  %v332 = vadd.f32 0.0, %v331
  %v333 = vpop.f32.mrf.mxu0
  %334 = vmatprep.mubr.f32.mxu0 0.0
  %335 = vmatmul.mubr.f32.gmra.mxu0 %v226
  %v336 = vpop.f32.mrf.mxu0
  %v337 = vadd.f32 0.0, %v336
  %v338 = vpop.f32.mrf.mxu0
  %339 = vmatprep.mubr.f32.mxu0 0.0
  %340 = vmatmul.mubr.f32.gmra.mxu0 %v227
  %v341 = vpop.f32.mrf.mxu0
  %v342 = vadd.f32 0.0, %v341
  %v343 = vpop.f32.mrf.mxu0
  %344 = vmatprep.mubr.f32.mxu0 0.0
  %345 = vmatmul.mubr.f32.gmra.mxu0 %v228
  %v346 = vpop.f32.mrf.mxu0
  %v347 = vadd.f32 0.0, %v346
  %v348 = vpop.f32.mrf.mxu0
  %349 = vmatprep.mubr.f32.mxu0 0.0
  %350 = vmatmul.mubr.f32.gmra.mxu0 %v229
  %v351 = vpop.f32.mrf.mxu0
  %v352 = vadd.f32 0.0, %v351
  %v353 = vpop.f32.mrf.mxu0
  %354 = vmatprep.mubr.f32.mxu0 0.0
  %355 = vmatmul.mubr.f32.gmra.mxu0 %v230
  %v356 = vpop.f32.mrf.mxu0
  %v357 = vadd.f32 0.0, %v356
  %v358 = vpop.f32.mrf.mxu0
  %359 = vmatprep.mubr.f32.mxu0 0.0
  %360 = vmatmul.mubr.f32.gmra.mxu0 %v231
  %v361 = vpop.f32.mrf.mxu0
  %v362 = vadd.f32 0.0, %v361
  %v363 = vpop.f32.mrf.mxu0
  %364 = vmatprep.mubr.f32.mxu0 0.0
  %365 = vmatmul.mubr.f32.gmra.mxu0 %v232
  %v366 = vpop.f32.mrf.mxu0
  %v367 = vadd.f32 0.0, %v366
  %v368 = vpop.f32.mrf.mxu0
  %369 = vmatprep.mubr.f32.mxu0 0.0
  %370 = vmatmul.mubr.f32.gmra.mxu0 %v233
  %v371 = vpop.f32.mrf.mxu0
  %v372 = vadd.f32 0.0, %v371
  %v373 = vpop.f32.mrf.mxu0
  %374 = vmatprep.mubr.f32.mxu0 0.0
  %375 = vmatmul.mubr.f32.gmra.mxu0 %v234
  %v376 = vpop.f32.mrf.mxu0
  %v377 = vadd.f32 0.0, %v376
  %v378 = vpop.f32.mrf.mxu0
  %379 = vmatprep.mubr.f32.mxu0 0.0
  %380 = vmatmul.mubr.f32.gmra.mxu0 %v235
  %v381 = vpop.f32.mrf.mxu0
  %v382 = vadd.f32 0.0, %v381
  %v383 = vpop.f32.mrf.mxu0
  %384 = vmatprep.mubr.f32.mxu0 0.0
  %385 = vmatmul.mubr.f32.gmra.mxu0 %v236
  %v386 = vpop.f32.mrf.mxu0
  %v387 = vadd.f32 0.0, %v386
  %v388 = vpop.f32.mrf.mxu0
  %389 = vmatprep.mubr.f32.mxu0 0.0
  %390 = vmatmul.mubr.f32.gmra.mxu0 %v237
  %v391 = vpop.f32.mrf.mxu0
  %v392 = vadd.f32 0.0, %v391
  %v393 = vpop.f32.mrf.mxu0
  %394 = vmatprep.mubr.f32.mxu0 0.0
  %395 = vmatmul.mubr.f32.gmra.mxu0 %v238
  %v396 = vpop.f32.mrf.mxu0
  %v397 = vadd.f32 0.0, %v396
  %v398 = vpop.f32.mrf.mxu0
  %399 = vdwg.mxu0
  %v400 = vpack.c.bf16 %v327, %v322
  %v401 = vpack.c.bf16 %v337, %v332
  %v402 = vpack.c.bf16 %v347, %v342
  %v403 = vpack.c.bf16 %v357, %v352
  %v404 = vpack.c.bf16 %v367, %v362
  %v405 = vpack.c.bf16 %v377, %v372
  %v406 = vpack.c.bf16 %v387, %v382
  %v407 = vpack.c.bf16 %v397, %v392
  %v416 = vunpack.c.l.b16 %v400
  %v417 = vunpack.c.h.b16 %v400
  %v418 = vunpack.c.l.b16 %v401
  %v419 = vunpack.c.h.b16 %v401
  %v420 = vunpack.c.l.b16 %v402
  %v421 = vunpack.c.h.b16 %v402
  %v422 = vunpack.c.l.b16 %v403
  %v423 = vunpack.c.h.b16 %v403
  %v424 = vunpack.c.l.b16 %v404
  %v425 = vunpack.c.h.b16 %v404
  %v426 = vunpack.c.l.b16 %v405
  %v427 = vunpack.c.h.b16 %v405
  %v428 = vunpack.c.l.b16 %v406
  %v429 = vunpack.c.h.b16 %v406
  %v430 = vunpack.c.l.b16 %v407
  %v431 = vunpack.c.h.b16 %v407
  %v432 = vpack.c.b16 %v416, %v416
  %v433 = vpack.c.b16 %v417, %v417
  %v434 = vpack.c.b16 %v418, %v418
  %v435 = vpack.c.b16 %v419, %v419
  %v436 = vpack.c.b16 %v420, %v420
  %v437 = vpack.c.b16 %v421, %v421
  %v438 = vpack.c.b16 %v422, %v422
  %v439 = vpack.c.b16 %v423, %v423
  %v440 = vpack.c.b16 %v424, %v424
  %v441 = vpack.c.b16 %v425, %v425
  %v442 = vpack.c.b16 %v426, %v426
  %v443 = vpack.c.b16 %v427, %v427
  %v444 = vpack.c.b16 %v428, %v428
  %v445 = vpack.c.b16 %v429, %v429
  %v446 = vpack.c.b16 %v430, %v430
  %v447 = vpack.c.b16 %v431, %v431
  %464 = vst [vmem:[%s10] sm:$0xf] %v432
  %465 = vst [vmem:[%s10 + $0x4] sm:$0xf] %v433
  %466 = vst [vmem:[%s10 + $0x8] sm:$0xf] %v434
  %467 = vst [vmem:[%s10 + $0xc] sm:$0xf] %v435
  %468 = vst [vmem:[%s10 + $0x10] sm:$0xf] %v436
  %469 = vst [vmem:[%s10 + $0x14] sm:$0xf] %v437
  %470 = vst [vmem:[%s10 + $0x18] sm:$0xf] %v438
  %471 = vst [vmem:[%s10 + $0x1c] sm:$0xf] %v439
  %472 = vst [vmem:[%s10 + $0x20] sm:$0xf] %v440
  %473 = vst [vmem:[%s10 + $0x24] sm:$0xf] %v441
  %474 = vst [vmem:[%s10 + $0x28] sm:$0xf] %v442
  %475 = vst [vmem:[%s10 + $0x2c] sm:$0xf] %v443
  %476 = vst [vmem:[%s10 + $0x30] sm:$0xf] %v444
  %477 = vst [vmem:[%s10 + $0x34] sm:$0xf] %v445
  %478 = vst [vmem:[%s10 + $0x38] sm:$0xf] %v446
  %479 = vst [vmem:[%s10 + $0x3c] sm:$0xf] %v447
  %v480 = vld [vmem:[%s4] sm:$0x1]
  %481 = vmatprep.subr.mxu0 0.0
  %482 = vmatpush1.xpose.msra.mxu0 %v397
  %483 = vmatprep.subr.mxu0 0.0
  %484 = vmatpush1.xpose.msra.mxu0 %v392
  %485 = vmatprep.subr.mxu0 0.0
  %486 = vmatpush1.xpose.msra.mxu0 %v387
  %487 = vmatprep.subr.mxu0 0.0
  %488 = vmatpush1.xpose.msra.mxu0 %v382
  %489 = vmatprep.subr.mxu0 0.0
  %490 = vmatpush1.xpose.msra.mxu0 %v377
  %491 = vmatprep.subr.mxu0 0.0
  %492 = vmatpush1.xpose.msra.mxu0 %v372
  %493 = vmatprep.subr.mxu0 0.0
  %494 = vmatpush1.xpose.msra.mxu0 %v367
  %495 = vmatprep.subr.mxu0 0.0
  %496 = vmatpush1.xpose.msra.mxu0 %v362
  %497 = vmatprep.subr.mxu0 0.0
  %498 = vmatpush1.xpose.msra.mxu0 %v357
  %499 = vmatprep.subr.mxu0 0.0
  %500 = vmatpush1.xpose.msra.mxu0 %v352
  %501 = vmatprep.subr.mxu0 0.0
  %502 = vmatpush1.xpose.msra.mxu0 %v347
  %503 = vmatprep.subr.mxu0 0.0
  %504 = vmatpush1.xpose.msra.mxu0 %v342
  %505 = vmatprep.subr.mxu0 0.0
  %506 = vmatpush1.xpose.msra.mxu0 %v337
  %507 = vmatprep.subr.mxu0 0.0
  %508 = vmatpush1.xpose.msra.mxu0 %v332
  %509 = vmatprep.subr.mxu0 0.0
  %510 = vmatpush1.xpose.msra.mxu0 %v327
  %511 = vmatprep.subr.mxu0 0.0
  %512 = vmatpush1.xpose.msra.mxu0 %v322
  %513 = vmatprep.subr.mxu0 0.0
  %514 = vmatpush2.xpose.msra.mxu0 0.0
  %515 = vmatprep.subr.mxu0 0.0
  %516 = vmatpush2.xpose.msra.mxu0 0.0
  %517 = vmatprep.subr.mxu0 0.0
  %518 = vmatpush2.xpose.msra.mxu0 0.0
  %519 = vmatprep.subr.mxu0 0.0
  %520 = vmatpush2.xpose.msra.mxu0 0.0
  %521 = vmatprep.subr.mxu0 0.0
  %522 = vmatpush2.xpose.msra.mxu0 0.0
  %523 = vmatprep.subr.mxu0 0.0
  %524 = vmatpush2.xpose.msra.mxu0 0.0
  %525 = vmatprep.subr.mxu0 0.0
  %526 = vmatpush2.xpose.msra.mxu0 0.0
  %527 = vmatprep.subr.mxu0 0.0
  %528 = vmatpush2.xpose.msra.mxu0 0.0
  %529 = vmatprep.subr.mxu0 0.0
  %530 = vmatpush2.xpose.msra.mxu0 0.0
  %531 = vmatprep.subr.mxu0 0.0
  %532 = vmatpush2.xpose.msra.mxu0 0.0
  %533 = vmatprep.subr.mxu0 0.0
  %534 = vmatpush2.xpose.msra.mxu0 0.0
  %535 = vmatprep.subr.mxu0 0.0
  %536 = vmatpush2.xpose.msra.mxu0 0.0
  %537 = vmatprep.subr.mxu0 0.0
  %538 = vmatpush2.xpose.msra.mxu0 0.0
  %539 = vmatprep.subr.mxu0 0.0
  %540 = vmatpush2.xpose.msra.mxu0 0.0
  %541 = vmatprep.subr.mxu0 0.0
  %542 = vmatpush2.xpose.msra.mxu0 0.0
  %543 = vmatprep.subr.mxu0 0.0
  %544 = vmatpush2.xpose.msra.mxu0 0.0
  %545 = vmatprep.mubr.f32.mxu0 0.0
  %546 = vmatmul.mubr.f32.gmra.mxu0 %v480
  %v547 = vpop.f32.mrf.mxu0
  %v548 = vadd.f32 0.0, %v547
  %v549 = vpop.f32.mrf.mxu0
  %550 = vdwg.mxu0
  %551 = vst [vmem:[%s11] sm:$0x1] %v548
  %v552 = vld [vmem:[%s5] sm:$0x1]
  %v554 = vlaneseq
  %v555 = vshrl.u32 %v554, 7
  %v556 = vsub.s32 0, %v555
  %v557 = vrot.slane %v552, %v556
  %v559 = vmul.f32 %v322, %v557
  %v560 = vmul.f32 %v327, %v557
  %v561 = vmul.f32 %v332, %v557
  %v562 = vmul.f32 %v337, %v557
  %v563 = vmul.f32 %v342, %v557
  %v564 = vmul.f32 %v347, %v557
  %v565 = vmul.f32 %v352, %v557
  %v566 = vmul.f32 %v357, %v557
  %v567 = vmul.f32 %v362, %v557
  %v568 = vmul.f32 %v367, %v557
  %v569 = vmul.f32 %v372, %v557
  %v570 = vmul.f32 %v377, %v557
  %v571 = vmul.f32 %v382, %v557
  %v572 = vmul.f32 %v387, %v557
  %v573 = vmul.f32 %v392, %v557
  %v574 = vmul.f32 %v397, %v557
  %575 = vadd.xlane.f32.xlu0 %v559
  %v576 = vpop.xlane.xlu0 %575
  %577 = vadd.xlane.f32.xlu0 %v560
  %v578 = vpop.xlane.xlu0 %577
  %579 = vadd.xlane.f32.xlu0 %v561
  %v580 = vpop.xlane.xlu0 %579
  %581 = vadd.xlane.f32.xlu0 %v562
  %v582 = vpop.xlane.xlu0 %581
  %583 = vadd.xlane.f32.xlu0 %v563
  %v584 = vpop.xlane.xlu0 %583
  %585 = vadd.xlane.f32.xlu0 %v564
  %v586 = vpop.xlane.xlu0 %585
  %587 = vadd.xlane.f32.xlu0 %v565
  %v588 = vpop.xlane.xlu0 %587
  %589 = vadd.xlane.f32.xlu0 %v566
  %v590 = vpop.xlane.xlu0 %589
  %591 = vadd.xlane.f32.xlu0 %v567
  %v592 = vpop.xlane.xlu0 %591
  %593 = vadd.xlane.f32.xlu0 %v568
  %v594 = vpop.xlane.xlu0 %593
  %595 = vadd.xlane.f32.xlu0 %v569
  %v596 = vpop.xlane.xlu0 %595
  %597 = vadd.xlane.f32.xlu0 %v570
  %v598 = vpop.xlane.xlu0 %597
  %599 = vadd.xlane.f32.xlu0 %v571
  %v600 = vpop.xlane.xlu0 %599
  %601 = vadd.xlane.f32.xlu0 %v572
  %v602 = vpop.xlane.xlu0 %601
  %603 = vadd.xlane.f32.xlu0 %v573
  %v604 = vpop.xlane.xlu0 %603
  %605 = vadd.xlane.f32.xlu0 %v574
  %v606 = vpop.xlane.xlu0 %605
  %vm607 = vcmask 7168
  %608 = vst.msk [vmem:[%s12] sm:$0xff] %vm607, %v576
  %609 = vst.msk [vmem:[%s12 + $0x8] sm:$0xff] %vm607, %v578
  %610 = vst.msk [vmem:[%s12 + $0x10] sm:$0xff] %vm607, %v580
  %611 = vst.msk [vmem:[%s12 + $0x18] sm:$0xff] %vm607, %v582
  %612 = vst.msk [vmem:[%s12 + $0x20] sm:$0xff] %vm607, %v584
  %613 = vst.msk [vmem:[%s12 + $0x28] sm:$0xff] %vm607, %v586
  %614 = vst.msk [vmem:[%s12 + $0x30] sm:$0xff] %vm607, %v588
  %615 = vst.msk [vmem:[%s12 + $0x38] sm:$0xff] %vm607, %v590
  %616 = vst.msk [vmem:[%s12 + $0x40] sm:$0xff] %vm607, %v592
  %617 = vst.msk [vmem:[%s12 + $0x48] sm:$0xff] %vm607, %v594
  %618 = vst.msk [vmem:[%s12 + $0x50] sm:$0xff] %vm607, %v596
  %619 = vst.msk [vmem:[%s12 + $0x58] sm:$0xff] %vm607, %v598
  %620 = vst.msk [vmem:[%s12 + $0x60] sm:$0xff] %vm607, %v600
  %621 = vst.msk [vmem:[%s12 + $0x68] sm:$0xff] %vm607, %v602
  %622 = vst.msk [vmem:[%s12 + $0x70] sm:$0xff] %vm607, %v604
  %623 = vst.msk [vmem:[%s12 + $0x78] sm:$0xff] %vm607, %v606
  %v624 = vld [vmem:[%s6] sm:$0xff]
  %v625 = vld [vmem:[%s6 + $0x8] sm:$0xff]
  %v626 = vld [vmem:[%s6 + $0x10] sm:$0xff]
  %v627 = vld [vmem:[%s6 + $0x18] sm:$0xff]
  %v628 = vld [vmem:[%s6 + $0x20] sm:$0xff]
  %v629 = vld [vmem:[%s6 + $0x28] sm:$0xff]
  %v630 = vld [vmem:[%s6 + $0x30] sm:$0xff]
  %v631 = vld [vmem:[%s6 + $0x38] sm:$0xff]
  %v632 = vld [vmem:[%s6 + $0x40] sm:$0xff]
  %v633 = vld [vmem:[%s6 + $0x48] sm:$0xff]
  %v634 = vld [vmem:[%s6 + $0x50] sm:$0xff]
  %v635 = vld [vmem:[%s6 + $0x58] sm:$0xff]
  %v636 = vld [vmem:[%s6 + $0x60] sm:$0xff]
  %v637 = vld [vmem:[%s6 + $0x68] sm:$0xff]
  %v638 = vld [vmem:[%s6 + $0x70] sm:$0xff]
  %v639 = vld [vmem:[%s6 + $0x78] sm:$0xff]
  %v640 = vld [vmem:[%s7] sm:$0xff]
  %v641 = vld [vmem:[%s7 + $0x8] sm:$0xff]
  %v642 = vld [vmem:[%s7 + $0x10] sm:$0xff]
  %v643 = vld [vmem:[%s7 + $0x18] sm:$0xff]
  %v644 = vld [vmem:[%s7 + $0x20] sm:$0xff]
  %v645 = vld [vmem:[%s7 + $0x28] sm:$0xff]
  %v646 = vld [vmem:[%s7 + $0x30] sm:$0xff]
  %v647 = vld [vmem:[%s7 + $0x38] sm:$0xff]
  %v648 = vld [vmem:[%s7 + $0x40] sm:$0xff]
  %v649 = vld [vmem:[%s7 + $0x48] sm:$0xff]
  %v650 = vld [vmem:[%s7 + $0x50] sm:$0xff]
  %v651 = vld [vmem:[%s7 + $0x58] sm:$0xff]
  %v652 = vld [vmem:[%s7 + $0x60] sm:$0xff]
  %v653 = vld [vmem:[%s7 + $0x68] sm:$0xff]
  %v654 = vld [vmem:[%s7 + $0x70] sm:$0xff]
  %v655 = vld [vmem:[%s7 + $0x78] sm:$0xff]
  %657 = vset.pattern.permute.xlu0 0
  %658 = vperm.xlu0 %657, %v640
  %v659 = vpop.permute.xlu0 %658
  %662 = vset.pattern.permute.xlu0 0
  %663 = vperm.xlu0 %662, %v641
  %v664 = vpop.permute.xlu0 %663
  %667 = vset.pattern.permute.xlu0 0
  %668 = vperm.xlu0 %667, %v642
  %v669 = vpop.permute.xlu0 %668
  %672 = vset.pattern.permute.xlu0 0
  %673 = vperm.xlu0 %672, %v643
  %v674 = vpop.permute.xlu0 %673
  %677 = vset.pattern.permute.xlu0 0
  %678 = vperm.xlu0 %677, %v644
  %v679 = vpop.permute.xlu0 %678
  %682 = vset.pattern.permute.xlu0 0
  %683 = vperm.xlu0 %682, %v645
  %v684 = vpop.permute.xlu0 %683
  %687 = vset.pattern.permute.xlu0 0
  %688 = vperm.xlu0 %687, %v646
  %v689 = vpop.permute.xlu0 %688
  %692 = vset.pattern.permute.xlu0 0
  %693 = vperm.xlu0 %692, %v647
  %v694 = vpop.permute.xlu0 %693
  %697 = vset.pattern.permute.xlu0 0
  %698 = vperm.xlu0 %697, %v648
  %v699 = vpop.permute.xlu0 %698
  %702 = vset.pattern.permute.xlu0 0
  %703 = vperm.xlu0 %702, %v649
  %v704 = vpop.permute.xlu0 %703
  %707 = vset.pattern.permute.xlu0 0
  %708 = vperm.xlu0 %707, %v650
  %v709 = vpop.permute.xlu0 %708
  %712 = vset.pattern.permute.xlu0 0
  %713 = vperm.xlu0 %712, %v651
  %v714 = vpop.permute.xlu0 %713
  %717 = vset.pattern.permute.xlu0 0
  %718 = vperm.xlu0 %717, %v652
  %v719 = vpop.permute.xlu0 %718
  %722 = vset.pattern.permute.xlu0 0
  %723 = vperm.xlu0 %722, %v653
  %v724 = vpop.permute.xlu0 %723
  %727 = vset.pattern.permute.xlu0 0
  %728 = vperm.xlu0 %727, %v654
  %v729 = vpop.permute.xlu0 %728
  %732 = vset.pattern.permute.xlu0 0
  %733 = vperm.xlu0 %732, %v655
  %v734 = vpop.permute.xlu0 %733
  %736 = vmatprep.subr.mxu0 0.0
  %737 = vmatpush1.msra.mxu0 %v54
  %738 = vmatprep.subr.mxu0 0.0
  %739 = vmatpush1.msra.mxu0 %v53
  %740 = vmatprep.subr.mxu0 0.0
  %741 = vmatpush1.msra.mxu0 %v52
  %742 = vmatprep.subr.mxu0 0.0
  %743 = vmatpush1.msra.mxu0 %v51
  %744 = vmatprep.subr.mxu0 0.0
  %745 = vmatpush1.msra.mxu0 %v50
  %746 = vmatprep.subr.mxu0 0.0
  %747 = vmatpush1.msra.mxu0 %v49
  %748 = vmatprep.subr.mxu0 0.0
  %749 = vmatpush1.msra.mxu0 %v48
  %750 = vmatprep.subr.mxu0 0.0
  %751 = vmatpush1.msra.mxu0 %v47
  %752 = vmatprep.subr.mxu0 0.0
  %753 = vmatpush1.msra.mxu0 %v46
  %754 = vmatprep.subr.mxu0 0.0
  %755 = vmatpush1.msra.mxu0 %v45
  %756 = vmatprep.subr.mxu0 0.0
  %757 = vmatpush1.msra.mxu0 %v44
  %758 = vmatprep.subr.mxu0 0.0
  %759 = vmatpush1.msra.mxu0 %v43
  %760 = vmatprep.subr.mxu0 0.0
  %761 = vmatpush1.msra.mxu0 %v42
  %762 = vmatprep.subr.mxu0 0.0
  %763 = vmatpush1.msra.mxu0 %v41
  %764 = vmatprep.subr.mxu0 0.0
  %765 = vmatpush1.msra.mxu0 %v40
  %766 = vmatprep.subr.mxu0 0.0
  %767 = vmatpush1.msra.mxu0 %v39
  %768 = vmatprep.subr.mxu0 0.0
  %769 = vmatpush2.msra.mxu0 0.0
  %770 = vmatprep.subr.mxu0 0.0
  %771 = vmatpush2.msra.mxu0 0.0
  %772 = vmatprep.subr.mxu0 0.0
  %773 = vmatpush2.msra.mxu0 0.0
  %774 = vmatprep.subr.mxu0 0.0
  %775 = vmatpush2.msra.mxu0 0.0
  %776 = vmatprep.subr.mxu0 0.0
  %777 = vmatpush2.msra.mxu0 0.0
  %778 = vmatprep.subr.mxu0 0.0
  %779 = vmatpush2.msra.mxu0 0.0
  %780 = vmatprep.subr.mxu0 0.0
  %781 = vmatpush2.msra.mxu0 0.0
  %782 = vmatprep.subr.mxu0 0.0
  %783 = vmatpush2.msra.mxu0 0.0
  %784 = vmatprep.subr.mxu0 0.0
  %785 = vmatpush2.msra.mxu0 0.0
  %786 = vmatprep.subr.mxu0 0.0
  %787 = vmatpush2.msra.mxu0 0.0
  %788 = vmatprep.subr.mxu0 0.0
  %789 = vmatpush2.msra.mxu0 0.0
  %790 = vmatprep.subr.mxu0 0.0
  %791 = vmatpush2.msra.mxu0 0.0
  %792 = vmatprep.subr.mxu0 0.0
  %793 = vmatpush2.msra.mxu0 0.0
  %794 = vmatprep.subr.mxu0 0.0
  %795 = vmatpush2.msra.mxu0 0.0
  %796 = vmatprep.subr.mxu0 0.0
  %797 = vmatpush2.msra.mxu0 0.0
  %798 = vmatprep.subr.mxu0 0.0
  %799 = vmatpush2.msra.mxu0 0.0
  %800 = vmatprep.mubr.f32.mxu0 0.0
  %801 = vmatmul.mubr.f32.gmra.mxu0 %v624
  %v802 = vpop.f32.mrf.mxu0
  %v803 = vadd.f32 %v659, %v802
  %v804 = vpop.f32.mrf.mxu0
  %805 = vmatprep.mubr.f32.mxu0 0.0
  %806 = vmatmul.mubr.f32.gmra.mxu0 %v625
  %v807 = vpop.f32.mrf.mxu0
  %v808 = vadd.f32 %v664, %v807
  %v809 = vpop.f32.mrf.mxu0
  %810 = vmatprep.mubr.f32.mxu0 0.0
  %811 = vmatmul.mubr.f32.gmra.mxu0 %v626
  %v812 = vpop.f32.mrf.mxu0
  %v813 = vadd.f32 %v669, %v812
  %v814 = vpop.f32.mrf.mxu0
  %815 = vmatprep.mubr.f32.mxu0 0.0
  %816 = vmatmul.mubr.f32.gmra.mxu0 %v627
  %v817 = vpop.f32.mrf.mxu0
  %v818 = vadd.f32 %v674, %v817
  %v819 = vpop.f32.mrf.mxu0
  %820 = vmatprep.mubr.f32.mxu0 0.0
  %821 = vmatmul.mubr.f32.gmra.mxu0 %v628
  %v822 = vpop.f32.mrf.mxu0
  %v823 = vadd.f32 %v679, %v822
  %v824 = vpop.f32.mrf.mxu0
  %825 = vmatprep.mubr.f32.mxu0 0.0
  %826 = vmatmul.mubr.f32.gmra.mxu0 %v629
  %v827 = vpop.f32.mrf.mxu0
  %v828 = vadd.f32 %v684, %v827
  %v829 = vpop.f32.mrf.mxu0
  %830 = vmatprep.mubr.f32.mxu0 0.0
  %831 = vmatmul.mubr.f32.gmra.mxu0 %v630
  %v832 = vpop.f32.mrf.mxu0
  %v833 = vadd.f32 %v689, %v832
  %v834 = vpop.f32.mrf.mxu0
  %835 = vmatprep.mubr.f32.mxu0 0.0
  %836 = vmatmul.mubr.f32.gmra.mxu0 %v631
  %v837 = vpop.f32.mrf.mxu0
  %v838 = vadd.f32 %v694, %v837
  %v839 = vpop.f32.mrf.mxu0
  %840 = vmatprep.mubr.f32.mxu0 0.0
  %841 = vmatmul.mubr.f32.gmra.mxu0 %v632
  %v842 = vpop.f32.mrf.mxu0
  %v843 = vadd.f32 %v699, %v842
  %v844 = vpop.f32.mrf.mxu0
  %845 = vmatprep.mubr.f32.mxu0 0.0
  %846 = vmatmul.mubr.f32.gmra.mxu0 %v633
  %v847 = vpop.f32.mrf.mxu0
  %v848 = vadd.f32 %v704, %v847
  %v849 = vpop.f32.mrf.mxu0
  %850 = vmatprep.mubr.f32.mxu0 0.0
  %851 = vmatmul.mubr.f32.gmra.mxu0 %v634
  %v852 = vpop.f32.mrf.mxu0
  %v853 = vadd.f32 %v709, %v852
  %v854 = vpop.f32.mrf.mxu0
  %855 = vmatprep.mubr.f32.mxu0 0.0
  %856 = vmatmul.mubr.f32.gmra.mxu0 %v635
  %v857 = vpop.f32.mrf.mxu0
  %v858 = vadd.f32 %v714, %v857
  %v859 = vpop.f32.mrf.mxu0
  %860 = vmatprep.mubr.f32.mxu0 0.0
  %861 = vmatmul.mubr.f32.gmra.mxu0 %v636
  %v862 = vpop.f32.mrf.mxu0
  %v863 = vadd.f32 %v719, %v862
  %v864 = vpop.f32.mrf.mxu0
  %865 = vmatprep.mubr.f32.mxu0 0.0
  %866 = vmatmul.mubr.f32.gmra.mxu0 %v637
  %v867 = vpop.f32.mrf.mxu0
  %v868 = vadd.f32 %v724, %v867
  %v869 = vpop.f32.mrf.mxu0
  %870 = vmatprep.mubr.f32.mxu0 0.0
  %871 = vmatmul.mubr.f32.gmra.mxu0 %v638
  %v872 = vpop.f32.mrf.mxu0
  %v873 = vadd.f32 %v729, %v872
  %v874 = vpop.f32.mrf.mxu0
  %875 = vmatprep.mubr.f32.mxu0 0.0
  %876 = vmatmul.mubr.f32.gmra.mxu0 %v639
  %v877 = vpop.f32.mrf.mxu0
  %v878 = vadd.f32 %v734, %v877
  %v879 = vpop.f32.mrf.mxu0
  %880 = vdwg.mxu0
  %v881 = vmax.f32 %v803, 0.0
  %v882 = vmax.f32 %v808, 0.0
  %v883 = vmax.f32 %v813, 0.0
  %v884 = vmax.f32 %v818, 0.0
  %v885 = vmax.f32 %v823, 0.0
  %v886 = vmax.f32 %v828, 0.0
  %v887 = vmax.f32 %v833, 0.0
  %v888 = vmax.f32 %v838, 0.0
  %v889 = vmax.f32 %v843, 0.0
  %v890 = vmax.f32 %v848, 0.0
  %v891 = vmax.f32 %v853, 0.0
  %v892 = vmax.f32 %v858, 0.0
  %v893 = vmax.f32 %v863, 0.0
  %v894 = vmax.f32 %v868, 0.0
  %v895 = vmax.f32 %v873, 0.0
  %v896 = vmax.f32 %v878, 0.0
  %v897 = vld [vmem:[%s8] sm:$0xff]
  %v898 = vld [vmem:[%s8 + $0x8] sm:$0xff]
  %v899 = vld [vmem:[%s8 + $0x10] sm:$0xff]
  %v900 = vld [vmem:[%s8 + $0x18] sm:$0xff]
  %v901 = vld [vmem:[%s8 + $0x20] sm:$0xff]
  %v902 = vld [vmem:[%s8 + $0x28] sm:$0xff]
  %v903 = vld [vmem:[%s8 + $0x30] sm:$0xff]
  %v904 = vld [vmem:[%s8 + $0x38] sm:$0xff]
  %v905 = vld [vmem:[%s8 + $0x40] sm:$0xff]
  %v906 = vld [vmem:[%s8 + $0x48] sm:$0xff]
  %v907 = vld [vmem:[%s8 + $0x50] sm:$0xff]
  %v908 = vld [vmem:[%s8 + $0x58] sm:$0xff]
  %v909 = vld [vmem:[%s8 + $0x60] sm:$0xff]
  %v910 = vld [vmem:[%s8 + $0x68] sm:$0xff]
  %v911 = vld [vmem:[%s8 + $0x70] sm:$0xff]
  %v912 = vld [vmem:[%s8 + $0x78] sm:$0xff]
  %v913 = vld [vmem:[%s9] sm:$0xff]
  %v914 = vld [vmem:[%s9 + $0x8] sm:$0xff]
  %v915 = vld [vmem:[%s9 + $0x10] sm:$0xff]
  %v916 = vld [vmem:[%s9 + $0x18] sm:$0xff]
  %v917 = vld [vmem:[%s9 + $0x20] sm:$0xff]
  %v918 = vld [vmem:[%s9 + $0x28] sm:$0xff]
  %v919 = vld [vmem:[%s9 + $0x30] sm:$0xff]
  %v920 = vld [vmem:[%s9 + $0x38] sm:$0xff]
  %v921 = vld [vmem:[%s9 + $0x40] sm:$0xff]
  %v922 = vld [vmem:[%s9 + $0x48] sm:$0xff]
  %v923 = vld [vmem:[%s9 + $0x50] sm:$0xff]
  %v924 = vld [vmem:[%s9 + $0x58] sm:$0xff]
  %v925 = vld [vmem:[%s9 + $0x60] sm:$0xff]
  %v926 = vld [vmem:[%s9 + $0x68] sm:$0xff]
  %v927 = vld [vmem:[%s9 + $0x70] sm:$0xff]
  %v928 = vld [vmem:[%s9 + $0x78] sm:$0xff]
  %930 = vset.pattern.permute.xlu0 0
  %931 = vperm.xlu0 %930, %v913
  %v932 = vpop.permute.xlu0 %931
  %935 = vset.pattern.permute.xlu0 0
  %936 = vperm.xlu0 %935, %v914
  %v937 = vpop.permute.xlu0 %936
  %940 = vset.pattern.permute.xlu0 0
  %941 = vperm.xlu0 %940, %v915
  %v942 = vpop.permute.xlu0 %941
  %945 = vset.pattern.permute.xlu0 0
  %946 = vperm.xlu0 %945, %v916
  %v947 = vpop.permute.xlu0 %946
  %950 = vset.pattern.permute.xlu0 0
  %951 = vperm.xlu0 %950, %v917
  %v952 = vpop.permute.xlu0 %951
  %955 = vset.pattern.permute.xlu0 0
  %956 = vperm.xlu0 %955, %v918
  %v957 = vpop.permute.xlu0 %956
  %960 = vset.pattern.permute.xlu0 0
  %961 = vperm.xlu0 %960, %v919
  %v962 = vpop.permute.xlu0 %961
  %965 = vset.pattern.permute.xlu0 0
  %966 = vperm.xlu0 %965, %v920
  %v967 = vpop.permute.xlu0 %966
  %970 = vset.pattern.permute.xlu0 0
  %971 = vperm.xlu0 %970, %v921
  %v972 = vpop.permute.xlu0 %971
  %975 = vset.pattern.permute.xlu0 0
  %976 = vperm.xlu0 %975, %v922
  %v977 = vpop.permute.xlu0 %976
  %980 = vset.pattern.permute.xlu0 0
  %981 = vperm.xlu0 %980, %v923
  %v982 = vpop.permute.xlu0 %981
  %985 = vset.pattern.permute.xlu0 0
  %986 = vperm.xlu0 %985, %v924
  %v987 = vpop.permute.xlu0 %986
  %990 = vset.pattern.permute.xlu0 0
  %991 = vperm.xlu0 %990, %v925
  %v992 = vpop.permute.xlu0 %991
  %995 = vset.pattern.permute.xlu0 0
  %996 = vperm.xlu0 %995, %v926
  %v997 = vpop.permute.xlu0 %996
  %1000 = vset.pattern.permute.xlu0 0
  %1001 = vperm.xlu0 %1000, %v927
  %v1002 = vpop.permute.xlu0 %1001
  %1005 = vset.pattern.permute.xlu0 0
  %1006 = vperm.xlu0 %1005, %v928
  %v1007 = vpop.permute.xlu0 %1006
  %1009 = vmatprep.subr.mxu0 0.0
  %1010 = vmatpush1.msra.mxu0 %v896
  %1011 = vmatprep.subr.mxu0 0.0
  %1012 = vmatpush1.msra.mxu0 %v895
  %1013 = vmatprep.subr.mxu0 0.0
  %1014 = vmatpush1.msra.mxu0 %v894
  %1015 = vmatprep.subr.mxu0 0.0
  %1016 = vmatpush1.msra.mxu0 %v893
  %1017 = vmatprep.subr.mxu0 0.0
  %1018 = vmatpush1.msra.mxu0 %v892
  %1019 = vmatprep.subr.mxu0 0.0
  %1020 = vmatpush1.msra.mxu0 %v891
  %1021 = vmatprep.subr.mxu0 0.0
  %1022 = vmatpush1.msra.mxu0 %v890
  %1023 = vmatprep.subr.mxu0 0.0
  %1024 = vmatpush1.msra.mxu0 %v889
  %1025 = vmatprep.subr.mxu0 0.0
  %1026 = vmatpush1.msra.mxu0 %v888
  %1027 = vmatprep.subr.mxu0 0.0
  %1028 = vmatpush1.msra.mxu0 %v887
  %1029 = vmatprep.subr.mxu0 0.0
  %1030 = vmatpush1.msra.mxu0 %v886
  %1031 = vmatprep.subr.mxu0 0.0
  %1032 = vmatpush1.msra.mxu0 %v885
  %1033 = vmatprep.subr.mxu0 0.0
  %1034 = vmatpush1.msra.mxu0 %v884
  %1035 = vmatprep.subr.mxu0 0.0
  %1036 = vmatpush1.msra.mxu0 %v883
  %1037 = vmatprep.subr.mxu0 0.0
  %1038 = vmatpush1.msra.mxu0 %v882
  %1039 = vmatprep.subr.mxu0 0.0
  %1040 = vmatpush1.msra.mxu0 %v881
  %1041 = vmatprep.subr.mxu0 0.0
  %1042 = vmatpush2.msra.mxu0 0.0
  %1043 = vmatprep.subr.mxu0 0.0
  %1044 = vmatpush2.msra.mxu0 0.0
  %1045 = vmatprep.subr.mxu0 0.0
  %1046 = vmatpush2.msra.mxu0 0.0
  %1047 = vmatprep.subr.mxu0 0.0
  %1048 = vmatpush2.msra.mxu0 0.0
  %1049 = vmatprep.subr.mxu0 0.0
  %1050 = vmatpush2.msra.mxu0 0.0
  %1051 = vmatprep.subr.mxu0 0.0
  %1052 = vmatpush2.msra.mxu0 0.0
  %1053 = vmatprep.subr.mxu0 0.0
  %1054 = vmatpush2.msra.mxu0 0.0
  %1055 = vmatprep.subr.mxu0 0.0
  %1056 = vmatpush2.msra.mxu0 0.0
  %1057 = vmatprep.subr.mxu0 0.0
  %1058 = vmatpush2.msra.mxu0 0.0
  %1059 = vmatprep.subr.mxu0 0.0
  %1060 = vmatpush2.msra.mxu0 0.0
  %1061 = vmatprep.subr.mxu0 0.0
  %1062 = vmatpush2.msra.mxu0 0.0
  %1063 = vmatprep.subr.mxu0 0.0
  %1064 = vmatpush2.msra.mxu0 0.0
  %1065 = vmatprep.subr.mxu0 0.0
  %1066 = vmatpush2.msra.mxu0 0.0
  %1067 = vmatprep.subr.mxu0 0.0
  %1068 = vmatpush2.msra.mxu0 0.0
  %1069 = vmatprep.subr.mxu0 0.0
  %1070 = vmatpush2.msra.mxu0 0.0
  %1071 = vmatprep.subr.mxu0 0.0
  %1072 = vmatpush2.msra.mxu0 0.0
  %1073 = vmatprep.mubr.f32.mxu0 0.0
  %1074 = vmatmul.mubr.f32.gmra.mxu0 %v897
  %v1075 = vpop.f32.mrf.mxu0
  %v1076 = vadd.f32 %v932, %v1075
  %v1077 = vpop.f32.mrf.mxu0
  %1078 = vmatprep.mubr.f32.mxu0 0.0
  %1079 = vmatmul.mubr.f32.gmra.mxu0 %v898
  %v1080 = vpop.f32.mrf.mxu0
  %v1081 = vadd.f32 %v937, %v1080
  %v1082 = vpop.f32.mrf.mxu0
  %1083 = vmatprep.mubr.f32.mxu0 0.0
  %1084 = vmatmul.mubr.f32.gmra.mxu0 %v899
  %v1085 = vpop.f32.mrf.mxu0
  %v1086 = vadd.f32 %v942, %v1085
  %v1087 = vpop.f32.mrf.mxu0
  %1088 = vmatprep.mubr.f32.mxu0 0.0
  %1089 = vmatmul.mubr.f32.gmra.mxu0 %v900
  %v1090 = vpop.f32.mrf.mxu0
  %v1091 = vadd.f32 %v947, %v1090
  %v1092 = vpop.f32.mrf.mxu0
  %1093 = vmatprep.mubr.f32.mxu0 0.0
  %1094 = vmatmul.mubr.f32.gmra.mxu0 %v901
  %v1095 = vpop.f32.mrf.mxu0
  %v1096 = vadd.f32 %v952, %v1095
  %v1097 = vpop.f32.mrf.mxu0
  %1098 = vmatprep.mubr.f32.mxu0 0.0
  %1099 = vmatmul.mubr.f32.gmra.mxu0 %v902
  %v1100 = vpop.f32.mrf.mxu0
  %v1101 = vadd.f32 %v957, %v1100
  %v1102 = vpop.f32.mrf.mxu0
  %1103 = vmatprep.mubr.f32.mxu0 0.0
  %1104 = vmatmul.mubr.f32.gmra.mxu0 %v903
  %v1105 = vpop.f32.mrf.mxu0
  %v1106 = vadd.f32 %v962, %v1105
  %v1107 = vpop.f32.mrf.mxu0
  %1108 = vmatprep.mubr.f32.mxu0 0.0
  %1109 = vmatmul.mubr.f32.gmra.mxu0 %v904
  %v1110 = vpop.f32.mrf.mxu0
  %v1111 = vadd.f32 %v967, %v1110
  %v1112 = vpop.f32.mrf.mxu0
  %1113 = vmatprep.mubr.f32.mxu0 0.0
  %1114 = vmatmul.mubr.f32.gmra.mxu0 %v905
  %v1115 = vpop.f32.mrf.mxu0
  %v1116 = vadd.f32 %v972, %v1115
  %v1117 = vpop.f32.mrf.mxu0
  %1118 = vmatprep.mubr.f32.mxu0 0.0
  %1119 = vmatmul.mubr.f32.gmra.mxu0 %v906
  %v1120 = vpop.f32.mrf.mxu0
  %v1121 = vadd.f32 %v977, %v1120
  %v1122 = vpop.f32.mrf.mxu0
  %1123 = vmatprep.mubr.f32.mxu0 0.0
  %1124 = vmatmul.mubr.f32.gmra.mxu0 %v907
  %v1125 = vpop.f32.mrf.mxu0
  %v1126 = vadd.f32 %v982, %v1125
  %v1127 = vpop.f32.mrf.mxu0
  %1128 = vmatprep.mubr.f32.mxu0 0.0
  %1129 = vmatmul.mubr.f32.gmra.mxu0 %v908
  %v1130 = vpop.f32.mrf.mxu0
  %v1131 = vadd.f32 %v987, %v1130
  %v1132 = vpop.f32.mrf.mxu0
  %1133 = vmatprep.mubr.f32.mxu0 0.0
  %1134 = vmatmul.mubr.f32.gmra.mxu0 %v909
  %v1135 = vpop.f32.mrf.mxu0
  %v1136 = vadd.f32 %v992, %v1135
  %v1137 = vpop.f32.mrf.mxu0
  %1138 = vmatprep.mubr.f32.mxu0 0.0
  %1139 = vmatmul.mubr.f32.gmra.mxu0 %v910
  %v1140 = vpop.f32.mrf.mxu0
  %v1141 = vadd.f32 %v997, %v1140
  %v1142 = vpop.f32.mrf.mxu0
  %1143 = vmatprep.mubr.f32.mxu0 0.0
  %1144 = vmatmul.mubr.f32.gmra.mxu0 %v911
  %v1145 = vpop.f32.mrf.mxu0
  %v1146 = vadd.f32 %v1002, %v1145
  %v1147 = vpop.f32.mrf.mxu0
  %1148 = vmatprep.mubr.f32.mxu0 0.0
  %1149 = vmatmul.mubr.f32.gmra.mxu0 %v912
  %v1150 = vpop.f32.mrf.mxu0
  %v1151 = vadd.f32 %v1007, %v1150
  %v1152 = vpop.f32.mrf.mxu0
  %1153 = vdwg.mxu0
  %v1154 = vpack.c.bf16 %v1081, %v1076
  %v1155 = vpack.c.bf16 %v1091, %v1086
  %v1156 = vpack.c.bf16 %v1101, %v1096
  %v1157 = vpack.c.bf16 %v1111, %v1106
  %v1158 = vpack.c.bf16 %v1121, %v1116
  %v1159 = vpack.c.bf16 %v1131, %v1126
  %v1160 = vpack.c.bf16 %v1141, %v1136
  %v1161 = vpack.c.bf16 %v1151, %v1146
  %v1170 = vunpack.c.l.b16 %v1154
  %v1171 = vunpack.c.h.b16 %v1154
  %v1172 = vunpack.c.l.b16 %v1155
  %v1173 = vunpack.c.h.b16 %v1155
  %v1174 = vunpack.c.l.b16 %v1156
  %v1175 = vunpack.c.h.b16 %v1156
  %v1176 = vunpack.c.l.b16 %v1157
  %v1177 = vunpack.c.h.b16 %v1157
  %v1178 = vunpack.c.l.b16 %v1158
  %v1179 = vunpack.c.h.b16 %v1158
  %v1180 = vunpack.c.l.b16 %v1159
  %v1181 = vunpack.c.h.b16 %v1159
  %v1182 = vunpack.c.l.b16 %v1160
  %v1183 = vunpack.c.h.b16 %v1160
  %v1184 = vunpack.c.l.b16 %v1161
  %v1185 = vunpack.c.h.b16 %v1161
  %v1186 = vpack.c.b16 %v1170, %v1170
  %v1187 = vpack.c.b16 %v1171, %v1171
  %v1188 = vpack.c.b16 %v1172, %v1172
  %v1189 = vpack.c.b16 %v1173, %v1173
  %v1190 = vpack.c.b16 %v1174, %v1174
  %v1191 = vpack.c.b16 %v1175, %v1175
  %v1192 = vpack.c.b16 %v1176, %v1176
  %v1193 = vpack.c.b16 %v1177, %v1177
  %v1194 = vpack.c.b16 %v1178, %v1178
  %v1195 = vpack.c.b16 %v1179, %v1179
  %v1196 = vpack.c.b16 %v1180, %v1180
  %v1197 = vpack.c.b16 %v1181, %v1181
  %v1198 = vpack.c.b16 %v1182, %v1182
  %v1199 = vpack.c.b16 %v1183, %v1183
  %v1200 = vpack.c.b16 %v1184, %v1184
  %v1201 = vpack.c.b16 %v1185, %v1185
  %1218 = vst [vmem:[%s13] sm:$0xf] %v1186
  %1219 = vst [vmem:[%s13 + $0x4] sm:$0xf] %v1187
  %1220 = vst [vmem:[%s13 + $0x8] sm:$0xf] %v1188
  %1221 = vst [vmem:[%s13 + $0xc] sm:$0xf] %v1189
  %1222 = vst [vmem:[%s13 + $0x10] sm:$0xf] %v1190
  %1223 = vst [vmem:[%s13 + $0x14] sm:$0xf] %v1191
  %1224 = vst [vmem:[%s13 + $0x18] sm:$0xf] %v1192
  %1225 = vst [vmem:[%s13 + $0x1c] sm:$0xf] %v1193
  %1226 = vst [vmem:[%s13 + $0x20] sm:$0xf] %v1194
  %1227 = vst [vmem:[%s13 + $0x24] sm:$0xf] %v1195
  %1228 = vst [vmem:[%s13 + $0x28] sm:$0xf] %v1196
  %1229 = vst [vmem:[%s13 + $0x2c] sm:$0xf] %v1197
  %1230 = vst [vmem:[%s13 + $0x30] sm:$0xf] %v1198
  %1231 = vst [vmem:[%s13 + $0x34] sm:$0xf] %v1199
  %1232 = vst [vmem:[%s13 + $0x38] sm:$0xf] %v1200
  %1233 = vst [vmem:[%s13 + $0x3c] sm:$0xf] %v1201
  // Predicated region
  $region42: #{anomalydae_forward.3} parent=0 // pred_check
    _
  $region43: #{anomalydae_forward.3} parent=0 // pred_check_branch
    %1235 = sbr.rel (0) target = $region45
  $region44: #{anomalydae_forward.3} parent=0 // pred_region
    _
  $region45: #{anomalydae_forward.3} parent=0 // pred_fallthru
    _
  // Predicated region
  $region46: #{anomalydae_forward.3} parent=0 // pred_check
    _
  $region47: #{anomalydae_forward.3} parent=0 // pred_check_branch
    %1237 = sbr.rel (0) target = $region49
  $region48: #{anomalydae_forward.3} parent=0 // pred_region
    _
  $region49: #{anomalydae_forward.3} parent=0 // pred_fallthru
    _
  // Predicated region
  $region50: #{anomalydae_forward.3} parent=0 // pred_check
    _
  $region51: #{anomalydae_forward.3} parent=0 // pred_check_branch
    %1239 = sbr.rel (0) target = $region53
  $region52: #{anomalydae_forward.3} parent=0 // pred_region
    _
  $region53: #{anomalydae_forward.3} parent=0 // pred_fallthru
    _
  // Predicated region
  $region54: #{anomalydae_forward.3} parent=0 // pred_check
    _
  $region55: #{anomalydae_forward.3} parent=0 // pred_check_branch
    %1241 = sbr.rel (0) target = $region57
  $region56: #{anomalydae_forward.3} parent=0 // pred_region
    _
  $region57: #{anomalydae_forward.3} parent=0 // pred_fallthru
    _
  // Predicated region
  $region58: #{anomalydae_forward.3} parent=0 // pred_check
    _
  $region59: #{anomalydae_forward.3} parent=0 // pred_check_branch
    %1243 = sbr.rel (0) target = $region61
  $region60: #{anomalydae_forward.3} parent=0 // pred_region
    _
  $region61: #{anomalydae_forward.3} parent=0 // pred_fallthru
    _
  // Predicated region
  $region62: #{anomalydae_forward.3} parent=0 // pred_check
    _
  $region63: #{anomalydae_forward.3} parent=0 // pred_check_branch
    %1245 = sbr.rel (0) target = $region65
  $region64: #{anomalydae_forward.3} parent=0 // pred_region
    _
  $region65: #{anomalydae_forward.3} parent=0 // pred_fallthru
    _
  // Predicated region
  $region66: #{anomalydae_forward.3} parent=0 // pred_check
    _
  $region67: #{anomalydae_forward.3} parent=0 // pred_check_branch
    %1247 = sbr.rel (0) target = $region69
  $region68: #{anomalydae_forward.3} parent=0 // pred_region
    _
  $region69: #{anomalydae_forward.3} parent=0 // pred_fallthru
    _
  // Predicated region
  $region70: #{anomalydae_forward.3} parent=0 // pred_check
    _
  $region71: #{anomalydae_forward.3} parent=0 // pred_check_branch
    %1249 = sbr.rel (0) target = $region73
  $region72: #{anomalydae_forward.3} parent=0 // pred_region
    _
  $region73: #{anomalydae_forward.3} parent=0 // pred_fallthru
    _

// kernel: anomalydae_forward.5
$region0: #{anomalydae_forward.5}
  #allocation0 [shape = 'u32[]', space=smem, size = 0x4, offset = 0x4, fixed_abs, tag = 'smem constant byte address 0x4 - core index']
  #allocation1 [shape = 'u32[144,128]{1,0:T(1,128)}', space=vmem, size = 0x12000, scoped, tag = 'internal scratch']
  %s0 = inlined_call_operand.vmem [shape: bf16[128,128], index: 0, kind: input, shape index: {}, may-alias: {0,1}]
  %s1 = inlined_call_operand.vmem [shape: bf16[128,128], index: 1, kind: input, shape index: {}, may-alias: {0,1}]
  %s2 = inlined_call_operand.vmem [shape: bf16[128,128], index: 2, kind: input, shape index: {}]
  %s3 = inlined_call_operand.vmem [shape: f32[128,128], index: 3, kind: output, shape index: {0}]
  %s4 = inlined_call_operand.vmem [shape: f32[128,128], index: 4, kind: output, shape index: {1}]
  %5 = xla_tuple %s3, %s4
  %s6 = sld [smem:[#allocation0]]
  $region30: #{anomalydae_forward.5} parent=0
    _
  %s8 = ssub.s32 1, %s6
  %s9 = scalar_select 0, %s8, %s6
  // Predicated region
  $region2: #{anomalydae_forward.5} parent=0 // pred_check
    _
  $region3: #{anomalydae_forward.5} parent=0 // pred_check_branch
    %11 = sbr.rel (0) target = $region5
  $region4: #{anomalydae_forward.5} parent=0 // pred_region
    _
  $region5: #{anomalydae_forward.5} parent=0 // pred_fallthru
    _
  // Predicated region
  $region6: #{anomalydae_forward.5} parent=0 // pred_check
    _
  $region7: #{anomalydae_forward.5} parent=0 // pred_check_branch
    %13 = sbr.rel (0) target = $region9
  $region8: #{anomalydae_forward.5} parent=0 // pred_region
    _
  $region9: #{anomalydae_forward.5} parent=0 // pred_fallthru
    _
  // Predicated region
  $region10: #{anomalydae_forward.5} parent=0 // pred_check
    _
  $region11: #{anomalydae_forward.5} parent=0 // pred_check_branch
    %15 = sbr.rel (0) target = $region13
  $region12: #{anomalydae_forward.5} parent=0 // pred_region
    _
  $region13: #{anomalydae_forward.5} parent=0 // pred_fallthru
    _
  %v17 = vld [vmem:[%s0] sm:$0xf]
  %v18 = vld [vmem:[%s0 + $0x4] sm:$0xf]
  %v19 = vld [vmem:[%s0 + $0x8] sm:$0xf]
  %v20 = vld [vmem:[%s0 + $0xc] sm:$0xf]
  %v21 = vld [vmem:[%s0 + $0x10] sm:$0xf]
  %v22 = vld [vmem:[%s0 + $0x14] sm:$0xf]
  %v23 = vld [vmem:[%s0 + $0x18] sm:$0xf]
  %v24 = vld [vmem:[%s0 + $0x1c] sm:$0xf]
  %v25 = vld [vmem:[%s0 + $0x20] sm:$0xf]
  %v26 = vld [vmem:[%s0 + $0x24] sm:$0xf]
  %v27 = vld [vmem:[%s0 + $0x28] sm:$0xf]
  %v28 = vld [vmem:[%s0 + $0x2c] sm:$0xf]
  %v29 = vld [vmem:[%s0 + $0x30] sm:$0xf]
  %v30 = vld [vmem:[%s0 + $0x34] sm:$0xf]
  %v31 = vld [vmem:[%s0 + $0x38] sm:$0xf]
  %v32 = vld [vmem:[%s0 + $0x3c] sm:$0xf]
  %v33 = vld [vmem:[%s1] sm:$0xf]
  %v34 = vld [vmem:[%s1 + $0x4] sm:$0xf]
  %v35 = vld [vmem:[%s1 + $0x8] sm:$0xf]
  %v36 = vld [vmem:[%s1 + $0xc] sm:$0xf]
  %v37 = vld [vmem:[%s1 + $0x10] sm:$0xf]
  %v38 = vld [vmem:[%s1 + $0x14] sm:$0xf]
  %v39 = vld [vmem:[%s1 + $0x18] sm:$0xf]
  %v40 = vld [vmem:[%s1 + $0x1c] sm:$0xf]
  %v41 = vld [vmem:[%s1 + $0x20] sm:$0xf]
  %v42 = vld [vmem:[%s1 + $0x24] sm:$0xf]
  %v43 = vld [vmem:[%s1 + $0x28] sm:$0xf]
  %v44 = vld [vmem:[%s1 + $0x2c] sm:$0xf]
  %v45 = vld [vmem:[%s1 + $0x30] sm:$0xf]
  %v46 = vld [vmem:[%s1 + $0x34] sm:$0xf]
  %v47 = vld [vmem:[%s1 + $0x38] sm:$0xf]
  %v48 = vld [vmem:[%s1 + $0x3c] sm:$0xf]
  %v65 = vunpack.c.l.b16 %v17
  %v66 = vunpack.c.l.b16 %v18
  %v67 = vunpack.c.l.b16 %v19
  %v68 = vunpack.c.l.b16 %v20
  %v69 = vunpack.c.l.b16 %v21
  %v70 = vunpack.c.l.b16 %v22
  %v71 = vunpack.c.l.b16 %v23
  %v72 = vunpack.c.l.b16 %v24
  %v73 = vunpack.c.l.b16 %v25
  %v74 = vunpack.c.l.b16 %v26
  %v75 = vunpack.c.l.b16 %v27
  %v76 = vunpack.c.l.b16 %v28
  %v77 = vunpack.c.l.b16 %v29
  %v78 = vunpack.c.l.b16 %v30
  %v79 = vunpack.c.l.b16 %v31
  %v80 = vunpack.c.l.b16 %v32
  %v81 = vpack.c.b16 %v66, %v65
  %v82 = vpack.c.b16 %v68, %v67
  %v83 = vpack.c.b16 %v70, %v69
  %v84 = vpack.c.b16 %v72, %v71
  %v85 = vpack.c.b16 %v74, %v73
  %v86 = vpack.c.b16 %v76, %v75
  %v87 = vpack.c.b16 %v78, %v77
  %v88 = vpack.c.b16 %v80, %v79
  %v113 = vunpack.c.l.b16 %v33
  %v114 = vunpack.c.l.b16 %v34
  %v115 = vunpack.c.l.b16 %v35
  %v116 = vunpack.c.l.b16 %v36
  %v117 = vunpack.c.l.b16 %v37
  %v118 = vunpack.c.l.b16 %v38
  %v119 = vunpack.c.l.b16 %v39
  %v120 = vunpack.c.l.b16 %v40
  %v121 = vunpack.c.l.b16 %v41
  %v122 = vunpack.c.l.b16 %v42
  %v123 = vunpack.c.l.b16 %v43
  %v124 = vunpack.c.l.b16 %v44
  %v125 = vunpack.c.l.b16 %v45
  %v126 = vunpack.c.l.b16 %v46
  %v127 = vunpack.c.l.b16 %v47
  %v128 = vunpack.c.l.b16 %v48
  %v129 = vpack.c.b16 %v114, %v113
  %v130 = vpack.c.b16 %v116, %v115
  %v131 = vpack.c.b16 %v118, %v117
  %v132 = vpack.c.b16 %v120, %v119
  %v133 = vpack.c.b16 %v122, %v121
  %v134 = vpack.c.b16 %v124, %v123
  %v135 = vpack.c.b16 %v126, %v125
  %v136 = vpack.c.b16 %v128, %v127
  %145 = vmatprep.subr.bf16.mxu0 0
  %146 = vmatpush1.bf16.xpose.msra.mxu0 %v136
  %147 = vmatprep.subr.bf16.mxu0 0
  %148 = vmatpush1.bf16.xpose.msra.mxu0 %v135
  %149 = vmatprep.subr.bf16.mxu0 0
  %150 = vmatpush1.bf16.xpose.msra.mxu0 %v134
  %151 = vmatprep.subr.bf16.mxu0 0
  %152 = vmatpush1.bf16.xpose.msra.mxu0 %v133
  %153 = vmatprep.subr.bf16.mxu0 0
  %154 = vmatpush1.bf16.xpose.msra.mxu0 %v132
  %155 = vmatprep.subr.bf16.mxu0 0
  %156 = vmatpush1.bf16.xpose.msra.mxu0 %v131
  %157 = vmatprep.subr.bf16.mxu0 0
  %158 = vmatpush1.bf16.xpose.msra.mxu0 %v130
  %159 = vmatprep.subr.bf16.mxu0 0
  %160 = vmatpush1.bf16.xpose.msra.mxu0 %v129
  %161 = vmatprep.subr.bf16.mxu0 0
  %162 = vmatpush2.bf16.xpose.msra.mxu0 0
  %163 = vmatprep.subr.bf16.mxu0 0
  %164 = vmatpush2.bf16.xpose.msra.mxu0 0
  %165 = vmatprep.subr.bf16.mxu0 0
  %166 = vmatpush2.bf16.xpose.msra.mxu0 0
  %167 = vmatprep.subr.bf16.mxu0 0
  %168 = vmatpush2.bf16.xpose.msra.mxu0 0
  %169 = vmatprep.subr.bf16.mxu0 0
  %170 = vmatpush2.bf16.xpose.msra.mxu0 0
  %171 = vmatprep.subr.bf16.mxu0 0
  %172 = vmatpush2.bf16.xpose.msra.mxu0 0
  %173 = vmatprep.subr.bf16.mxu0 0
  %174 = vmatpush2.bf16.xpose.msra.mxu0 0
  %175 = vmatprep.subr.bf16.mxu0 0
  %176 = vmatpush2.bf16.xpose.msra.mxu0 0
  %177 = vmatprep.mubr.bf16.mxu0 0
  %178 = vmatmul.mubr.bf16.gmra.mxu0 %v81
  %v179 = vpop.f32.mrf.mxu0
  %v180 = vadd.f32 0.0, %v179
  %v181 = vpop.f32.mrf.mxu0
  %v182 = vpop.f32.mrf.mxu0
  %v183 = vadd.f32 0.0, %v182
  %v184 = vpop.f32.mrf.mxu0
  %185 = vmatprep.mubr.bf16.mxu0 0
  %186 = vmatmul.mubr.bf16.gmra.mxu0 %v82
  %v187 = vpop.f32.mrf.mxu0
  %v188 = vadd.f32 0.0, %v187
  %v189 = vpop.f32.mrf.mxu0
  %v190 = vpop.f32.mrf.mxu0
  %v191 = vadd.f32 0.0, %v190
  %v192 = vpop.f32.mrf.mxu0
  %193 = vmatprep.mubr.bf16.mxu0 0
  %194 = vmatmul.mubr.bf16.gmra.mxu0 %v83
  %v195 = vpop.f32.mrf.mxu0
  %v196 = vadd.f32 0.0, %v195
  %v197 = vpop.f32.mrf.mxu0
  %v198 = vpop.f32.mrf.mxu0
  %v199 = vadd.f32 0.0, %v198
  %v200 = vpop.f32.mrf.mxu0
  %201 = vmatprep.mubr.bf16.mxu0 0
  %202 = vmatmul.mubr.bf16.gmra.mxu0 %v84
  %v203 = vpop.f32.mrf.mxu0
  %v204 = vadd.f32 0.0, %v203
  %v205 = vpop.f32.mrf.mxu0
  %v206 = vpop.f32.mrf.mxu0
  %v207 = vadd.f32 0.0, %v206
  %v208 = vpop.f32.mrf.mxu0
  %209 = vmatprep.mubr.bf16.mxu0 0
  %210 = vmatmul.mubr.bf16.gmra.mxu0 %v85
  %v211 = vpop.f32.mrf.mxu0
  %v212 = vadd.f32 0.0, %v211
  %v213 = vpop.f32.mrf.mxu0
  %v214 = vpop.f32.mrf.mxu0
  %v215 = vadd.f32 0.0, %v214
  %v216 = vpop.f32.mrf.mxu0
  %217 = vmatprep.mubr.bf16.mxu0 0
  %218 = vmatmul.mubr.bf16.gmra.mxu0 %v86
  %v219 = vpop.f32.mrf.mxu0
  %v220 = vadd.f32 0.0, %v219
  %v221 = vpop.f32.mrf.mxu0
  %v222 = vpop.f32.mrf.mxu0
  %v223 = vadd.f32 0.0, %v222
  %v224 = vpop.f32.mrf.mxu0
  %225 = vmatprep.mubr.bf16.mxu0 0
  %226 = vmatmul.mubr.bf16.gmra.mxu0 %v87
  %v227 = vpop.f32.mrf.mxu0
  %v228 = vadd.f32 0.0, %v227
  %v229 = vpop.f32.mrf.mxu0
  %v230 = vpop.f32.mrf.mxu0
  %v231 = vadd.f32 0.0, %v230
  %v232 = vpop.f32.mrf.mxu0
  %233 = vmatprep.mubr.bf16.mxu0 0
  %234 = vmatmul.mubr.bf16.gmra.mxu0 %v88
  %v235 = vpop.f32.mrf.mxu0
  %v236 = vadd.f32 0.0, %v235
  %v237 = vpop.f32.mrf.mxu0
  %v238 = vpop.f32.mrf.mxu0
  %v239 = vadd.f32 0.0, %v238
  %v240 = vpop.f32.mrf.mxu0
  %241 = vdwg.mxu0
  %242 = vst [vmem:[%s3] sm:$0xff] %v180
  %243 = vst [vmem:[%s3 + $0x8] sm:$0xff] %v183
  %244 = vst [vmem:[%s3 + $0x10] sm:$0xff] %v188
  %245 = vst [vmem:[%s3 + $0x18] sm:$0xff] %v191
  %246 = vst [vmem:[%s3 + $0x20] sm:$0xff] %v196
  %247 = vst [vmem:[%s3 + $0x28] sm:$0xff] %v199
  %248 = vst [vmem:[%s3 + $0x30] sm:$0xff] %v204
  %249 = vst [vmem:[%s3 + $0x38] sm:$0xff] %v207
  %250 = vst [vmem:[%s3 + $0x40] sm:$0xff] %v212
  %251 = vst [vmem:[%s3 + $0x48] sm:$0xff] %v215
  %252 = vst [vmem:[%s3 + $0x50] sm:$0xff] %v220
  %253 = vst [vmem:[%s3 + $0x58] sm:$0xff] %v223
  %254 = vst [vmem:[%s3 + $0x60] sm:$0xff] %v228
  %255 = vst [vmem:[%s3 + $0x68] sm:$0xff] %v231
  %256 = vst [vmem:[%s3 + $0x70] sm:$0xff] %v236
  %257 = vst [vmem:[%s3 + $0x78] sm:$0xff] %v239
  %v258 = vld [vmem:[%s2] sm:$0xf]
  %v259 = vld [vmem:[%s2 + $0x4] sm:$0xf]
  %v260 = vld [vmem:[%s2 + $0x8] sm:$0xf]
  %v261 = vld [vmem:[%s2 + $0xc] sm:$0xf]
  %v262 = vld [vmem:[%s2 + $0x10] sm:$0xf]
  %v263 = vld [vmem:[%s2 + $0x14] sm:$0xf]
  %v264 = vld [vmem:[%s2 + $0x18] sm:$0xf]
  %v265 = vld [vmem:[%s2 + $0x1c] sm:$0xf]
  %v266 = vld [vmem:[%s2 + $0x20] sm:$0xf]
  %v267 = vld [vmem:[%s2 + $0x24] sm:$0xf]
  %v268 = vld [vmem:[%s2 + $0x28] sm:$0xf]
  %v269 = vld [vmem:[%s2 + $0x2c] sm:$0xf]
  %v270 = vld [vmem:[%s2 + $0x30] sm:$0xf]
  %v271 = vld [vmem:[%s2 + $0x34] sm:$0xf]
  %v272 = vld [vmem:[%s2 + $0x38] sm:$0xf]
  %v273 = vld [vmem:[%s2 + $0x3c] sm:$0xf]
  %v290 = vunpack.c.l.b16 %v258
  %v291 = vunpack.c.l.b16 %v259
  %v292 = vunpack.c.l.b16 %v260
  %v293 = vunpack.c.l.b16 %v261
  %v294 = vunpack.c.l.b16 %v262
  %v295 = vunpack.c.l.b16 %v263
  %v296 = vunpack.c.l.b16 %v264
  %v297 = vunpack.c.l.b16 %v265
  %v298 = vunpack.c.l.b16 %v266
  %v299 = vunpack.c.l.b16 %v267
  %v300 = vunpack.c.l.b16 %v268
  %v301 = vunpack.c.l.b16 %v269
  %v302 = vunpack.c.l.b16 %v270
  %v303 = vunpack.c.l.b16 %v271
  %v304 = vunpack.c.l.b16 %v272
  %v305 = vunpack.c.l.b16 %v273
  %v306 = vpack.c.b16 %v291, %v290
  %v307 = vpack.c.b16 %v293, %v292
  %v308 = vpack.c.b16 %v295, %v294
  %v309 = vpack.c.b16 %v297, %v296
  %v310 = vpack.c.b16 %v299, %v298
  %v311 = vpack.c.b16 %v301, %v300
  %v312 = vpack.c.b16 %v303, %v302
  %v313 = vpack.c.b16 %v305, %v304
  %322 = vmatprep.subr.bf16.mxu0 0
  %323 = vmatpush1.bf16.msra.mxu0 %v313
  %324 = vmatprep.subr.bf16.mxu0 0
  %325 = vmatpush1.bf16.msra.mxu0 %v312
  %326 = vmatprep.subr.bf16.mxu0 0
  %327 = vmatpush1.bf16.msra.mxu0 %v311
  %328 = vmatprep.subr.bf16.mxu0 0
  %329 = vmatpush1.bf16.msra.mxu0 %v310
  %330 = vmatprep.subr.bf16.mxu0 0
  %331 = vmatpush1.bf16.msra.mxu0 %v309
  %332 = vmatprep.subr.bf16.mxu0 0
  %333 = vmatpush1.bf16.msra.mxu0 %v308
  %334 = vmatprep.subr.bf16.mxu0 0
  %335 = vmatpush1.bf16.msra.mxu0 %v307
  %336 = vmatprep.subr.bf16.mxu0 0
  %337 = vmatpush1.bf16.msra.mxu0 %v306
  %338 = vmatprep.subr.bf16.mxu0 0
  %339 = vmatpush2.bf16.msra.mxu0 0
  %340 = vmatprep.subr.bf16.mxu0 0
  %341 = vmatpush2.bf16.msra.mxu0 0
  %342 = vmatprep.subr.bf16.mxu0 0
  %343 = vmatpush2.bf16.msra.mxu0 0
  %344 = vmatprep.subr.bf16.mxu0 0
  %345 = vmatpush2.bf16.msra.mxu0 0
  %346 = vmatprep.subr.bf16.mxu0 0
  %347 = vmatpush2.bf16.msra.mxu0 0
  %348 = vmatprep.subr.bf16.mxu0 0
  %349 = vmatpush2.bf16.msra.mxu0 0
  %350 = vmatprep.subr.bf16.mxu0 0
  %351 = vmatpush2.bf16.msra.mxu0 0
  %352 = vmatprep.subr.bf16.mxu0 0
  %353 = vmatpush2.bf16.msra.mxu0 0
  %354 = vmatprep.mubr.bf16.mxu0 0
  %355 = vmatmul.mubr.bf16.gmra.mxu0 %v81
  %v356 = vpop.f32.mrf.mxu0
  %v357 = vadd.f32 0.0, %v356
  %v358 = vpop.f32.mrf.mxu0
  %v359 = vpop.f32.mrf.mxu0
  %v360 = vadd.f32 0.0, %v359
  %v361 = vpop.f32.mrf.mxu0
  %362 = vmatprep.mubr.bf16.mxu0 0
  %363 = vmatmul.mubr.bf16.gmra.mxu0 %v82
  %v364 = vpop.f32.mrf.mxu0
  %v365 = vadd.f32 0.0, %v364
  %v366 = vpop.f32.mrf.mxu0
  %v367 = vpop.f32.mrf.mxu0
  %v368 = vadd.f32 0.0, %v367
  %v369 = vpop.f32.mrf.mxu0
  %370 = vmatprep.mubr.bf16.mxu0 0
  %371 = vmatmul.mubr.bf16.gmra.mxu0 %v83
  %v372 = vpop.f32.mrf.mxu0
  %v373 = vadd.f32 0.0, %v372
  %v374 = vpop.f32.mrf.mxu0
  %v375 = vpop.f32.mrf.mxu0
  %v376 = vadd.f32 0.0, %v375
  %v377 = vpop.f32.mrf.mxu0
  %378 = vmatprep.mubr.bf16.mxu0 0
  %379 = vmatmul.mubr.bf16.gmra.mxu0 %v84
  %v380 = vpop.f32.mrf.mxu0
  %v381 = vadd.f32 0.0, %v380
  %v382 = vpop.f32.mrf.mxu0
  %v383 = vpop.f32.mrf.mxu0
  %v384 = vadd.f32 0.0, %v383
  %v385 = vpop.f32.mrf.mxu0
  %386 = vmatprep.mubr.bf16.mxu0 0
  %387 = vmatmul.mubr.bf16.gmra.mxu0 %v85
  %v388 = vpop.f32.mrf.mxu0
  %v389 = vadd.f32 0.0, %v388
  %v390 = vpop.f32.mrf.mxu0
  %v391 = vpop.f32.mrf.mxu0
  %v392 = vadd.f32 0.0, %v391
  %v393 = vpop.f32.mrf.mxu0
  %394 = vmatprep.mubr.bf16.mxu0 0
  %395 = vmatmul.mubr.bf16.gmra.mxu0 %v86
  %v396 = vpop.f32.mrf.mxu0
  %v397 = vadd.f32 0.0, %v396
  %v398 = vpop.f32.mrf.mxu0
  %v399 = vpop.f32.mrf.mxu0
  %v400 = vadd.f32 0.0, %v399
  %v401 = vpop.f32.mrf.mxu0
  %402 = vmatprep.mubr.bf16.mxu0 0
  %403 = vmatmul.mubr.bf16.gmra.mxu0 %v87
  %v404 = vpop.f32.mrf.mxu0
  %v405 = vadd.f32 0.0, %v404
  %v406 = vpop.f32.mrf.mxu0
  %v407 = vpop.f32.mrf.mxu0
  %v408 = vadd.f32 0.0, %v407
  %v409 = vpop.f32.mrf.mxu0
  %410 = vmatprep.mubr.bf16.mxu0 0
  %411 = vmatmul.mubr.bf16.gmra.mxu0 %v88
  %v412 = vpop.f32.mrf.mxu0
  %v413 = vadd.f32 0.0, %v412
  %v414 = vpop.f32.mrf.mxu0
  %v415 = vpop.f32.mrf.mxu0
  %v416 = vadd.f32 0.0, %v415
  %v417 = vpop.f32.mrf.mxu0
  %418 = vdwg.mxu0
  %419 = vst [vmem:[%s4] sm:$0xff] %v357
  %420 = vst [vmem:[%s4 + $0x8] sm:$0xff] %v360
  %421 = vst [vmem:[%s4 + $0x10] sm:$0xff] %v365
  %422 = vst [vmem:[%s4 + $0x18] sm:$0xff] %v368
  %423 = vst [vmem:[%s4 + $0x20] sm:$0xff] %v373
  %424 = vst [vmem:[%s4 + $0x28] sm:$0xff] %v376
  %425 = vst [vmem:[%s4 + $0x30] sm:$0xff] %v381
  %426 = vst [vmem:[%s4 + $0x38] sm:$0xff] %v384
  %427 = vst [vmem:[%s4 + $0x40] sm:$0xff] %v389
  %428 = vst [vmem:[%s4 + $0x48] sm:$0xff] %v392
  %429 = vst [vmem:[%s4 + $0x50] sm:$0xff] %v397
  %430 = vst [vmem:[%s4 + $0x58] sm:$0xff] %v400
  %431 = vst [vmem:[%s4 + $0x60] sm:$0xff] %v405
  %432 = vst [vmem:[%s4 + $0x68] sm:$0xff] %v408
  %433 = vst [vmem:[%s4 + $0x70] sm:$0xff] %v413
  %434 = vst [vmem:[%s4 + $0x78] sm:$0xff] %v416
  // Predicated region
  $region14: #{anomalydae_forward.5} parent=0 // pred_check
    _
  $region15: #{anomalydae_forward.5} parent=0 // pred_check_branch
    %436 = sbr.rel (0) target = $region17
  $region16: #{anomalydae_forward.5} parent=0 // pred_region
    _
  $region17: #{anomalydae_forward.5} parent=0 // pred_fallthru
    _
  // Predicated region
  $region18: #{anomalydae_forward.5} parent=0 // pred_check
    _
  $region19: #{anomalydae_forward.5} parent=0 // pred_check_branch
    %438 = sbr.rel (0) target = $region21
  $region20: #{anomalydae_forward.5} parent=0 // pred_region
    _
  $region21: #{anomalydae_forward.5} parent=0 // pred_fallthru
    _
  // Predicated region
  $region22: #{anomalydae_forward.5} parent=0 // pred_check
    _
  $region23: #{anomalydae_forward.5} parent=0 // pred_check_branch
    %440 = sbr.rel (0) target = $region25
  $region24: #{anomalydae_forward.5} parent=0 // pred_region
    _
  $region25: #{anomalydae_forward.5} parent=0 // pred_fallthru
    _
  // Predicated region
  $region26: #{anomalydae_forward.5} parent=0 // pred_check
    _
  $region27: #{anomalydae_forward.5} parent=0 // pred_check_branch
    %442 = sbr.rel (0) target = $region29
  $region28: #{anomalydae_forward.5} parent=0 // pred_region
    _
  $region29: #{anomalydae_forward.5} parent=0 // pred_fallthru
    _

</llo_original>
